<compile_context>
chip_gen: v6e
topology: v6e:2x2x1
jax: 0.10.0
libtpu: 0.0.40
codegen_flags: <defaults>
</compile_context>

<pallas_src>
import numpy as np
import jax
import jax.numpy as jnp
from jax.experimental import pallas as pl
from jax.experimental.pallas import tpu as pltpu

HIDDEN = 64        # hidden_dim of the module
LANE = 128         # lane width of each sub-block in the packed weight slabs
OUT_PAD = 128      # fc output padded to a full lane width; sliced to output_dim outside
NP = 128           # node count padded to a lane/sublane friendly size


# ----------------------------- Pallas kernel ---------------------------------

def gcn_kernel(x_ref, pcat_ref, w1_ref, w2_ref, wfc_ref, out_ref):
    def layer(h_aug, w_ref):
        # w slab = [root+bias+ones-carrier | B | W], each block LANE lanes wide.
        y = jnp.dot(h_aug, w_ref[...], preferred_element_type=jnp.float32)        # (NP, 3*LANE)
        # Stack the B- and W-projected messages for a single K = 2*NP dot.
        # Slices are lane-tile aligned (offsets 128 / 256) -> no relayout cost.
        y_stack = jnp.concatenate([y[:, LANE:2 * LANE], y[:, 2 * LANE:]], axis=0)  # (2*NP, LANE)
        # Pcat = [P0 | P1] is loaded here, right next to the dot that consumes it
        # (keeps vreg pressure low; the scheduler streams it with vld).
        aggr = jnp.dot(pcat_ref[...], y_stack, preferred_element_type=jnp.float32)  # (NP, LANE)
        # Column HIDDEN of y[:, :LANE] is the folded-bias "ones" carrier (value 1),
        # aggr is 0 there, and relu keeps it at 1 for the next layer's bias row.
        return jnp.maximum(y[:, :LANE] + aggr, 0.0)

    h1 = layer(x_ref[...], w1_ref)     # conv1 + relu
    h2 = layer(h1, w2_ref)             # conv2 + relu
    # fc: bias folded into row HIDDEN of wfc_ref (h2[:, HIDDEN] == 1).
    out_ref[...] = jnp.dot(h2, wfc_ref[...], preferred_element_type=jnp.float32)


def gcn_forward(x_aug, pcat, w1_slab, w2_slab, wfc_slab):
    B, Np, din1 = x_aug.shape
    flops = 2 * B * Np * (din1 * 3 * LANE        # conv1 projection
                          + 2 * Np * LANE        # conv1 aggregation (K = 2*Np)
                          + LANE * 3 * LANE      # conv2 projection
                          + 2 * Np * LANE        # conv2 aggregation
                          + LANE * OUT_PAD)      # fc
    bytes_accessed = 4 * (x_aug.size + pcat.size + B * Np * OUT_PAD
                          + w1_slab.size + w2_slab.size + wfc_slab.size)
    return pl.pallas_call(
        gcn_kernel,
        out_shape=jax.ShapeDtypeStruct((B, Np, OUT_PAD), jnp.float32),
        grid_spec=pltpu.PrefetchScalarGridSpec(
            num_scalar_prefetch=0,
            grid=(B,),
            in_specs=[
                pl.BlockSpec((None, Np, din1), lambda b: (b, 0, 0)),     # per-graph x
                pl.BlockSpec((None, Np, 2 * Np), lambda b: (b, 0, 0)),   # per-graph Pcat
                pl.BlockSpec(tuple(w1_slab.shape), lambda b: (0, 0)),    # shared weights
                pl.BlockSpec(tuple(w2_slab.shape), lambda b: (0, 0)),
                pl.BlockSpec(tuple(wfc_slab.shape), lambda b: (0, 0)),
            ],
            out_specs=pl.BlockSpec((None, Np, OUT_PAD), lambda b: (b, 0, 0)),
        ),
        compiler_params=pltpu.CompilerParams(
            dimension_semantics=("parallel",)),
        cost_estimate=pl.CostEstimate(flops=int(flops), transcendentals=0,
                                      bytes_accessed=int(bytes_accessed)),
    )(x_aug, pcat, w1_slab, w2_slab, wfc_slab)


# ----------------- host-side graph -> propagation slab -------------------------

def build_pcat(src, tgt, edge_attr, n_real, n_pad):
    """Fold the graph (once per graph) into Pcat = [P0 | P1]:
       P0[i,j] = sum_{e: j->i} 1/deg_i,  P1[i,j] = sum_{e: j->i} ea_e/deg_i,
       so each NNConv layer is  relu(h@root + P0@(h@B) + P1@(h@W) + bias)."""
    deg = np.bincount(tgt, minlength=n_real).astype(np.float32)
    inv_deg = 1.0 / np.maximum(deg, 1.0)
    p0 = np.zeros((n_pad, n_pad), dtype=np.float32)
    p1 = np.zeros((n_pad, n_pad), dtype=np.float32)
    np.add.at(p0, (tgt, src), inv_deg[tgt])                 # np.add.at handles parallel edges
    np.add.at(p1, (tgt, src), inv_deg[tgt] * edge_attr)
    return np.concatenate([p0, p1], axis=1)                 # (n_pad, 2*n_pad)


def pack_layer_slab(root, b_mat, w_mat, bias, rows):
    """[root | B | W] packed into 128-lane sub-blocks; the layer bias is an extra
       input row and column HIDDEN of the root block carries a constant 1 so the
       *next* layer's bias row sees a ones feature without any in-kernel concat."""
    d_in, h = root.shape
    slab = np.zeros((rows, 3 * LANE), dtype=np.float32)
    slab[:d_in, :h] = root
    slab[d_in, :h] = bias
    slab[d_in, h] = 1.0                       # ones carrier
    slab[:d_in, LANE:LANE + h] = b_mat
    slab[:d_in, 2 * LANE:2 * LANE + h] = w_mat
    return slab


# --------------------------- plain-numpy reference ----------------------------

def gcn_reference(x, src, tgt, ea, params, N):
    (w1w, w1b, root1, b1, w2w, w2b, root2, b2, wfc, bfc) = params
    ea = ea.reshape(-1, 1)

    def nnconv(h, ww, wb, root, bias):
        hsrc = h[src]                                      # (E, d_in)
        msg = hsrc @ wb + ea * (hsrc @ ww)                 # (E, d_out)
        agg = np.zeros((N, msg.shape[1]), dtype=np.float32)
        np.add.at(agg, tgt, msg)
        deg = np.bincount(tgt, minlength=N).reshape(-1, 1).astype(np.float32)
        agg = agg / np.maximum(deg, 1.0)
        return h @ root + agg + bias

    h1 = np.maximum(nnconv(x, w1w, w1b, root1, b1), 0.0)
    h2 = np.maximum(nnconv(h1, w2w, w2b, root2, b2), 0.0)
    return h2 @ wfc + bfc


# --------------------------------- main ---------------------------------------

if __name__ == "__main__":
    key = jax.random.PRNGKey(0)
    ks = jax.random.split(key, 32)

    N = 100
    input_dim = 4
    hidden_dim = HIDDEN
    output_dim = 2
    comm_range = 4.5   # keeps the random graphs sparse
    BATCH = 4          # batch of independent graphs over the parallel grid axis

    scale = 0.1
    def rnd(k, shape):
        return np.asarray(scale * jax.random.normal(k, shape, dtype=jnp.float32))

    # NNConv with Linear(1, in*out) edge nets: per-edge weight matrix = B + ea * W,
    # where B = reshaped lin.bias and W = reshaped lin.weight.
    w1w = rnd(ks[0], (input_dim, hidden_dim))
    w1b = rnd(ks[1], (input_dim, hidden_dim))
    root1 = rnd(ks[2], (input_dim, hidden_dim))
    b1 = rnd(ks[3], (hidden_dim,))
    w2w = rnd(ks[4], (hidden_dim, hidden_dim))
    w2b = rnd(ks[5], (hidden_dim, hidden_dim))
    root2 = rnd(ks[6], (hidden_dim, hidden_dim))
    b2 = rnd(ks[7], (hidden_dim,))
    wfc = rnd(ks[8], (hidden_dim, output_dim))
    bfc = rnd(ks[9], (output_dim,))

    w1_slab = pack_layer_slab(root1, w1b, w1w, b1, rows=input_dim + 1)   # (5, 384)
    w2_slab = pack_layer_slab(root2, w2b, w2w, b2, rows=LANE)            # (128, 384)
    wfc_slab = np.zeros((LANE, OUT_PAD), dtype=np.float32)
    wfc_slab[:hidden_dim, :output_dim] = wfc
    wfc_slab[hidden_dim, :output_dim] = bfc                              # fc bias row

    # Build a small batch of graphs. Per-graph forward semantics match the module;
    # the batch grid axis only amortizes per-call overhead / megacore-shards on v7x.
    # TODO(synk): KDTree graph generation / compute_node_features are host-side data
    # prep in the original script, not part of the nn.Module forward; approximated
    # here with random positions and random node features.
    xs, pcats, graph_data = [], [], []
    for g in range(BATCH):
        pos = np.asarray(jax.random.uniform(ks[10 + 2 * g], (N, 2),
                                            minval=0.0, maxval=10.0))
        d = np.linalg.norm(pos[:, None, :] - pos[None, :, :], axis=-1)
        mask = (d < comm_range) & ~np.eye(N, dtype=bool)
        src, tgt = np.nonzero(mask)
        src = src.astype(np.int32)
        tgt = tgt.astype(np.int32)
        edge_attr = d[src, tgt].astype(np.float32)          # (E,) scalar edge attribute

        x = np.asarray(jax.random.normal(ks[11 + 2 * g], (N, input_dim),
                                         dtype=jnp.float32))
        # pad nodes to NP and append the ones column (folded layer-1 bias).
        x_aug = np.zeros((NP, input_dim + 1), dtype=np.float32)
        x_aug[:N, :input_dim] = x
        x_aug[:, input_dim] = 1.0

        xs.append(x_aug)
        pcats.append(build_pcat(src, tgt, edge_attr, N, NP))
        graph_data.append((x, src, tgt, edge_attr))

    x_b = jnp.asarray(np.stack(xs))          # (B, 128, 5)
    pcat_b = jnp.asarray(np.stack(pcats))    # (B, 128, 256)

    out_pad = gcn_forward(x_b, pcat_b, jnp.asarray(w1_slab),
                          jnp.asarray(w2_slab), jnp.asarray(wfc_slab))
    out_pad = np.asarray(jax.block_until_ready(out_pad))

    params = (w1w, w1b, root1, b1, w2w, w2b, root2, b2, wfc, bfc)
    for g in range(BATCH):
        x, src, tgt, ea = graph_data[g]
        ref = gcn_reference(x, src, tgt, ea, params, N)
        out = out_pad[g, :N, :output_dim]
        if not np.allclose(out, ref, rtol=1e-4, atol=1e-4):
            raise AssertionError(f"Pallas output for graph {g} does not match reference")

    print("KERNEL_OK")
</pallas_src>

<mosaic_0001>
module attributes {stable_mosaic.version = 11 : i64} {
  func.func @gcn_kernel(%arg0: i32, %arg1: memref<1x128x5xf32, #tpu.memory_space<vmem>>, %arg2: memref<1x128x256xf32, #tpu.memory_space<vmem>>, %arg3: memref<5x384xf32, #tpu.memory_space<vmem>>, %arg4: memref<128x384xf32, #tpu.memory_space<vmem>>, %arg5: memref<128x128xf32, #tpu.memory_space<vmem>>, %arg6: memref<1x128x128xf32, #tpu.memory_space<vmem>>) attributes {dimension_semantics = [#tpu.dimension_semantics<parallel>], iteration_bounds = array<i64: 4>, scalar_prefetch = 0 : i64, scratch_operands = 0 : i64, tpu.core_type = #tpu.core_type<tc>, window_params = [{transform_indices = @transform_0, window_bounds = array<i64: 1, 128, 5>}, {transform_indices = @transform_1, window_bounds = array<i64: 1, 128, 256>}, {pipeline_mode = #tpu.pipeline_mode<synchronous>, transform_indices = @transform_2, window_bounds = array<i64: 5, 384>}, {pipeline_mode = #tpu.pipeline_mode<synchronous>, transform_indices = @transform_3, window_bounds = array<i64: 128, 384>}, {pipeline_mode = #tpu.pipeline_mode<synchronous>, transform_indices = @transform_4, window_bounds = array<i64: 128, 128>}, {transform_indices = @transform_5, window_bounds = array<i64: 1, 128, 128>}]} {
    %c0 = arith.constant 0 : index
    %c0_0 = arith.constant 0 : index
    %c0_1 = arith.constant 0 : index
    %0 = vector.load %arg1[%c0, %c0_0, %c0_1] : memref<1x128x5xf32, #tpu.memory_space<vmem>>, vector<1x128x5xf32>
    %1 = vector.shape_cast %0 : vector<1x128x5xf32> to vector<128x5xf32>
    %c0_2 = arith.constant 0 : index
    %c0_3 = arith.constant 0 : index
    %2 = vector.load %arg3[%c0_2, %c0_3] : memref<5x384xf32, #tpu.memory_space<vmem>>, vector<5x384xf32>
    %cst = arith.constant dense<0.000000e+00> : vector<128x384xf32>
    %3 = tpu.matmul %1, %2, %cst {dimension_numbers = #tpu.dot_dimension_numbers<[1], [0], [0], [1], [0, 0, 1, 1], [], []>} : vector<128x5xf32>, vector<5x384xf32>, vector<128x384xf32> -> vector<128x384xf32>
    %4 = vector.extract_strided_slice %3 {offsets = [0, 128], sizes = [128, 128], strides = [1, 1]} : vector<128x384xf32> to vector<128x128xf32>
    %5 = vector.extract_strided_slice %3 {offsets = [0, 256], sizes = [128, 128], strides = [1, 1]} : vector<128x384xf32> to vector<128x128xf32>
    %6 = tpu.concatenate %4, %5 in 0 : vector<128x128xf32>, vector<128x128xf32> -> vector<256x128xf32>
    %c0_4 = arith.constant 0 : index
    %c0_5 = arith.constant 0 : index
    %c0_6 = arith.constant 0 : index
    %7 = vector.load %arg2[%c0_4, %c0_5, %c0_6] : memref<1x128x256xf32, #tpu.memory_space<vmem>>, vector<1x128x256xf32>
    %8 = vector.shape_cast %7 : vector<1x128x256xf32> to vector<128x256xf32>
    %cst_7 = arith.constant dense<0.000000e+00> : vector<128x128xf32>
    %9 = tpu.matmul %8, %6, %cst_7 {dimension_numbers = #tpu.dot_dimension_numbers<[1], [0], [0], [1], [0, 0, 1, 1], [], []>} : vector<128x256xf32>, vector<256x128xf32>, vector<128x128xf32> -> vector<128x128xf32>
    %10 = vector.extract_strided_slice %3 {offsets = [0, 0], sizes = [128, 128], strides = [1, 1]} : vector<128x384xf32> to vector<128x128xf32>
    %11 = arith.addf %10, %9 : vector<128x128xf32>
    %cst_8 = arith.constant 0.000000e+00 : f32
    %12 = vector.broadcast %cst_8 : f32 to vector<128x128xf32>
    %13 = arith.maximumf %11, %12 : vector<128x128xf32>
    %c0_9 = arith.constant 0 : index
    %c0_10 = arith.constant 0 : index
    %14 = vector.load %arg4[%c0_9, %c0_10] : memref<128x384xf32, #tpu.memory_space<vmem>>, vector<128x384xf32>
    %cst_11 = arith.constant dense<0.000000e+00> : vector<128x384xf32>
    %15 = tpu.matmul %13, %14, %cst_11 {dimension_numbers = #tpu.dot_dimension_numbers<[1], [0], [0], [1], [0, 0, 1, 1], [], []>} : vector<128x128xf32>, vector<128x384xf32>, vector<128x384xf32> -> vector<128x384xf32>
    %16 = vector.extract_strided_slice %15 {offsets = [0, 128], sizes = [128, 128], strides = [1, 1]} : vector<128x384xf32> to vector<128x128xf32>
    %17 = vector.extract_strided_slice %15 {offsets = [0, 256], sizes = [128, 128], strides = [1, 1]} : vector<128x384xf32> to vector<128x128xf32>
    %18 = tpu.concatenate %16, %17 in 0 : vector<128x128xf32>, vector<128x128xf32> -> vector<256x128xf32>
    %c0_12 = arith.constant 0 : index
    %c0_13 = arith.constant 0 : index
    %c0_14 = arith.constant 0 : index
    %19 = vector.load %arg2[%c0_12, %c0_13, %c0_14] : memref<1x128x256xf32, #tpu.memory_space<vmem>>, vector<1x128x256xf32>
    %20 = vector.shape_cast %19 : vector<1x128x256xf32> to vector<128x256xf32>
    %cst_15 = arith.constant dense<0.000000e+00> : vector<128x128xf32>
    %21 = tpu.matmul %20, %18, %cst_15 {dimension_numbers = #tpu.dot_dimension_numbers<[1], [0], [0], [1], [0, 0, 1, 1], [], []>} : vector<128x256xf32>, vector<256x128xf32>, vector<128x128xf32> -> vector<128x128xf32>
    %22 = vector.extract_strided_slice %15 {offsets = [0, 0], sizes = [128, 128], strides = [1, 1]} : vector<128x384xf32> to vector<128x128xf32>
    %23 = arith.addf %22, %21 : vector<128x128xf32>
    %cst_16 = arith.constant 0.000000e+00 : f32
    %24 = vector.broadcast %cst_16 : f32 to vector<128x128xf32>
    %25 = arith.maximumf %23, %24 : vector<128x128xf32>
    %c0_17 = arith.constant 0 : index
    %c0_18 = arith.constant 0 : index
    %26 = vector.load %arg5[%c0_17, %c0_18] : memref<128x128xf32, #tpu.memory_space<vmem>>, vector<128x128xf32>
    %cst_19 = arith.constant dense<0.000000e+00> : vector<128x128xf32>
    %27 = tpu.matmul %25, %26, %cst_19 {dimension_numbers = #tpu.dot_dimension_numbers<[1], [0], [0], [1], [0, 0, 1, 1], [], []>} : vector<128x128xf32>, vector<128x128xf32>, vector<128x128xf32> -> vector<128x128xf32>
    %c0_20 = arith.constant 0 : index
    %c0_21 = arith.constant 0 : index
    %c0_22 = arith.constant 0 : index
    %28 = vector.load %arg6[%c0_20, %c0_21, %c0_22] : memref<1x128x128xf32, #tpu.memory_space<vmem>>, vector<1x128x128xf32>
    %29 = vector.shape_cast %28 : vector<1x128x128xf32> to vector<128x128xf32>
    %30 = vector.shape_cast %27 : vector<128x128xf32> to vector<1x128x128xf32>
    tpu.vector_store %arg6[%c0_20, %c0_21, %c0_22], %30 {strides = array<i32>} : memref<1x128x128xf32, #tpu.memory_space<vmem>>, vector<1x128x128xf32>,
    return
  }
  func.func @transform_0(%arg0: i32) -> (i32, i32, i32) {
    %c0_i32 = arith.constant 0 : i32
    %c0_i32_0 = arith.constant 0 : i32
    %c0_i32_1 = arith.constant 0 : i32
    return %arg0, %c0_i32, %c0_i32_0 : i32, i32, i32
  }
  func.func @transform_1(%arg0: i32) -> (i32, i32, i32) {
    %c0_i32 = arith.constant 0 : i32
    %c0_i32_0 = arith.constant 0 : i32
    %c0_i32_1 = arith.constant 0 : i32
    return %arg0, %c0_i32, %c0_i32_0 : i32, i32, i32
  }
  func.func @transform_2(%arg0: i32) -> (i32, i32) {
    %c0_i32 = arith.constant 0 : i32
    %c0_i32_0 = arith.constant 0 : i32
    %c0_i32_1 = arith.constant 0 : i32
    return %c0_i32, %c0_i32_0 : i32, i32
  }
  func.func @transform_3(%arg0: i32) -> (i32, i32) {
    %c0_i32 = arith.constant 0 : i32
    %c0_i32_0 = arith.constant 0 : i32
    %c0_i32_1 = arith.constant 0 : i32
    return %c0_i32, %c0_i32_0 : i32, i32
  }
  func.func @transform_4(%arg0: i32) -> (i32, i32) {
    %c0_i32 = arith.constant 0 : i32
    %c0_i32_0 = arith.constant 0 : i32
    %c0_i32_1 = arith.constant 0 : i32
    return %c0_i32, %c0_i32_0 : i32, i32
  }
  func.func @transform_5(%arg0: i32) -> (i32, i32, i32) {
    %c0_i32 = arith.constant 0 : i32
    %c0_i32_0 = arith.constant 0 : i32
    %c0_i32_1 = arith.constant 0 : i32
    return %arg0, %c0_i32, %c0_i32_0 : i32, i32, i32
  }
}

</mosaic_0001>

<llo_original>
// kernel: tpu_custom_call.1
$region0: #{tpu_custom_call.1}
  #allocation0 [shape = 'u32[]', space=smem, size = 0x4, offset = 0x4, fixed_abs, tag = 'smem constant byte address 0x4 - core index']
  #allocation1 [shape = 'u32[144,128]{1,0:T(1,128)}', space=vmem, size = 0x12000, scoped, tag = 'internal scratch']
  %s0 = inlined_call_operand.vmem [shape: f32[4,128,5], index: 0, kind: input, shape index: {}]
  %s1 = inlined_call_operand.hbm [shape: f32[4,128,256], index: 1, kind: input, shape index: {}]
  %s2 = inlined_call_operand.vmem [shape: f32[5,384], index: 2, kind: input, shape index: {}]
  %s3 = inlined_call_operand.vmem [shape: f32[128,384], index: 3, kind: input, shape index: {}]
  %s4 = inlined_call_operand.vmem [shape: f32[128,128], index: 4, kind: input, shape index: {}]
  %s5 = inlined_call_operand.hbm [shape: f32[4,128,128], index: 5, kind: output, shape index: {}]
  %s6 = sld [smem:[#allocation0]]
  $region57: #{tpu_custom_call.1} parent=0
    _
  %s8 = ssub.s32 1, %s6
  %s9 = scalar_select 0, %s8, %s6
  $region1: #{tpu_custom_call.1} parent=0
    #allocation2 [shape = 'u8[262144]{0}', space=vmem, size = 0x40000, scoped, tag = 'input window, operand 1']
    #allocation3 [shape = 's32[2]{0}', space=sflag, size = 0x8, scoped, tag = 'scoped memory for tpu_custom_call.1']
    #allocation4 [shape = 's32[2]{0}', space=sflag, size = 0x8, scoped, tag = 'scoped memory for tpu_custom_call.1']
    #allocation5 [shape = 'u8[131072]{0}', space=vmem, size = 0x20000, scoped, tag = 'output window, operand 0']
    %10 = vsyncpa [#allocation3], 0
    %s11 = scalar_lea.sflag [#allocation3], 1
    %12 = vsyncpa %s11, 0
    %13 = vsyncpa [#allocation4], 0
    %s14 = scalar_lea.sflag [#allocation4], 1
    %15 = vsyncpa %s14, 0
    loop: start=0, step=1, limit=6
    $region2: #{tpu_custom_call.1} parent=1 // loop_pre_header
      _
    $region3: #{tpu_custom_call.1} parent=1 // loop_header
      %s17 = sphi 0, %s21
      %p18 = scmp.ge.s32.totalorder %s17, 6
      %s27 = sphi 0, %s29
      %s30 = sphi 0, %s27
      %s31 = sphi 0, %s30
      %s47 = sphi 0, %s31
      %s53 = sphi 0, %s55
      %s56 = sphi 0, %s53
      %s57 = sphi 0, %s56
      %s73 = sphi 0, %s57
      %s77 = sphi 0, %s77
      %s79 = sphi 0, %s77
      %s80 = sphi 0, %s79
      %s94 = sphi 0, %s80
      %s98 = sphi 0, %s98
      %s100 = sphi 0, %s98
      %s101 = sphi 0, %s100
      %s115 = sphi 0, %s101
      %s119 = sphi 0, %s119
      %s121 = sphi 0, %s119
      %s122 = sphi 0, %s121
      %s136 = sphi 0, %s122
      %s142 = sphi 0, %s144
      %s145 = sphi 0, %s142
      %s146 = sphi 0, %s145
      %s162 = sphi 0, %s146
    $region4: #{tpu_custom_call.1} parent=1 // loop_header_branch
      %20 = sbr.rel (%p18) target = $region8
    $region5: #{tpu_custom_call.1} parent=1 // loop_body
      %s22 = ssub.s32 %s17, 1
      %s23 = ssub.s32 %s17, 2
      %s24 = sadd.s32 %s17, 1
      %s25 = ssub.s32 %s17, %s24
      %p26 = scmp.eq.s32.totalorder %s25, 0
      %s28 = sadd.s32 %s27, 1
      %s29 = scalar_select %p26, %s27, %s28
      %p32 = pneg %p26
      %p33 = scmp.eq.s32.totalorder %s17, 3
      %p34 = por %p32, %p33
      %p35 = scmp.ne.s32.totalorder %s27, %s30
      %p36 = scmp.eq.s32.totalorder %s17, 0
      %p37 = por %p35, %p36
      %p38 = scmp.ne.s32.totalorder %s27, %s30
      %p39 = scmp.eq.s32.totalorder %s22, 3
      %p40 = por %p38, %p39
      %p41 = scmp.ne.s32.totalorder %s30, %s31
      %p42 = scmp.eq.s32.totalorder %s22, 0
      %p43 = por %p41, %p42
      %p44 = scmp.ne.s32.totalorder %s30, %s31
      %p45 = scmp.eq.s32.totalorder %s23, 3
      %p46 = por %p44, %p45
      %p48 = scmp.ne.s32.totalorder %s31, %s47
      %p49 = scmp.eq.s32.totalorder %s23, 0
      %p50 = por %p48, %p49
      %s51 = ssub.s32 %s17, %s24
      %p52 = scmp.eq.s32.totalorder %s51, 0
      %s54 = sadd.s32 %s53, 1
      %s55 = scalar_select %p52, %s53, %s54
      %p58 = pneg %p52
      %p59 = scmp.eq.s32.totalorder %s17, 3
      %p60 = por %p58, %p59
      %p61 = scmp.ne.s32.totalorder %s53, %s56
      %p62 = scmp.eq.s32.totalorder %s17, 0
      %p63 = por %p61, %p62
      %p64 = scmp.ne.s32.totalorder %s53, %s56
      %p65 = scmp.eq.s32.totalorder %s22, 3
      %p66 = por %p64, %p65
      %p67 = scmp.ne.s32.totalorder %s56, %s57
      %p68 = scmp.eq.s32.totalorder %s22, 0
      %p69 = por %p67, %p68
      %p70 = scmp.ne.s32.totalorder %s56, %s57
      %p71 = scmp.eq.s32.totalorder %s23, 3
      %p72 = por %p70, %p71
      %p74 = scmp.ne.s32.totalorder %s57, %s73
      %p75 = scmp.eq.s32.totalorder %s23, 0
      %p76 = por %p74, %p75
      %s78 = sadd.s32 %s77, 1
      %p81 = scmp.eq.s32.totalorder %s17, 3
      %p82 = scmp.ne.s32.totalorder %s77, %s79
      %p83 = scmp.eq.s32.totalorder %s17, 0
      %p84 = por %p82, %p83
      %p85 = scmp.ne.s32.totalorder %s77, %s79
      %p86 = scmp.eq.s32.totalorder %s22, 3
      %p87 = por %p85, %p86
      %p88 = scmp.ne.s32.totalorder %s79, %s80
      %p89 = scmp.eq.s32.totalorder %s22, 0
      %p90 = por %p88, %p89
      %p91 = scmp.ne.s32.totalorder %s79, %s80
      %p92 = scmp.eq.s32.totalorder %s23, 3
      %p93 = por %p91, %p92
      %p95 = scmp.ne.s32.totalorder %s80, %s94
      %p96 = scmp.eq.s32.totalorder %s23, 0
      %p97 = por %p95, %p96
      %s99 = sadd.s32 %s98, 1
      %p102 = scmp.eq.s32.totalorder %s17, 3
      %p103 = scmp.ne.s32.totalorder %s98, %s100
      %p104 = scmp.eq.s32.totalorder %s17, 0
      %p105 = por %p103, %p104
      %p106 = scmp.ne.s32.totalorder %s98, %s100
      %p107 = scmp.eq.s32.totalorder %s22, 3
      %p108 = por %p106, %p107
      %p109 = scmp.ne.s32.totalorder %s100, %s101
      %p110 = scmp.eq.s32.totalorder %s22, 0
      %p111 = por %p109, %p110
      %p112 = scmp.ne.s32.totalorder %s100, %s101
      %p113 = scmp.eq.s32.totalorder %s23, 3
      %p114 = por %p112, %p113
      %p116 = scmp.ne.s32.totalorder %s101, %s115
      %p117 = scmp.eq.s32.totalorder %s23, 0
      %p118 = por %p116, %p117
      %s120 = sadd.s32 %s119, 1
      %p123 = scmp.eq.s32.totalorder %s17, 3
      %p124 = scmp.ne.s32.totalorder %s119, %s121
      %p125 = scmp.eq.s32.totalorder %s17, 0
      %p126 = por %p124, %p125
      %p127 = scmp.ne.s32.totalorder %s119, %s121
      %p128 = scmp.eq.s32.totalorder %s22, 3
      %p129 = por %p127, %p128
      %p130 = scmp.ne.s32.totalorder %s121, %s122
      %p131 = scmp.eq.s32.totalorder %s22, 0
      %p132 = por %p130, %p131
      %p133 = scmp.ne.s32.totalorder %s121, %s122
      %p134 = scmp.eq.s32.totalorder %s23, 3
      %p135 = por %p133, %p134
      %p137 = scmp.ne.s32.totalorder %s122, %s136
      %p138 = scmp.eq.s32.totalorder %s23, 0
      %p139 = por %p137, %p138
      %s140 = ssub.s32 %s17, %s24
      %p141 = scmp.eq.s32.totalorder %s140, 0
      %s143 = sadd.s32 %s142, 1
      %s144 = scalar_select %p141, %s142, %s143
      %p147 = pneg %p141
      %p148 = scmp.eq.s32.totalorder %s17, 3
      %p149 = por %p147, %p148
      %p150 = scmp.ne.s32.totalorder %s142, %s145
      %p151 = scmp.eq.s32.totalorder %s17, 0
      %p152 = por %p150, %p151
      %p153 = scmp.ne.s32.totalorder %s142, %s145
      %p154 = scmp.eq.s32.totalorder %s22, 3
      %p155 = por %p153, %p154
      %p156 = scmp.ne.s32.totalorder %s145, %s146
      %p157 = scmp.eq.s32.totalorder %s22, 0
      %p158 = por %p156, %p157
      %p159 = scmp.ne.s32.totalorder %s145, %s146
      %p160 = scmp.eq.s32.totalorder %s23, 3
      %p161 = por %p159, %p160
      %p163 = scmp.ne.s32.totalorder %s146, %s162
      %p164 = scmp.eq.s32.totalorder %s23, 0
      %p165 = por %p163, %p164
      %p166 = scmp.le.s32.totalorder 1, %s17
      %p167 = scmp.lt.s32.totalorder %s17, 5
      %p168 = pnand %p166, %p167
      %p169 = pneg %p168
      // Predicated region
      $region9: #{tpu_custom_call.1} parent=5 // pred_check
        _
      $region10: #{tpu_custom_call.1} parent=5 // pred_check_branch
        %171 = sbr.rel (%p168) target = $region12
      $region11: #{tpu_custom_call.1} parent=5 // pred_region
        %s172 = ssub.s32 %s17, 1
        // Predicated region
        $region13: #{tpu_custom_call.1} parent=11 // pred_check
          %p173 = pneg %p90
        $region14: #{tpu_custom_call.1} parent=11 // pred_check_branch
          %175 = sbr.rel (%p173) target = $region16
        $region15: #{tpu_custom_call.1} parent=11 // pred_region
          _
        $region16: #{tpu_custom_call.1} parent=11 // pred_fallthru
          _
        // Predicated region
        $region17: #{tpu_custom_call.1} parent=11 // pred_check
          %p176 = pneg %p111
        $region18: #{tpu_custom_call.1} parent=11 // pred_check_branch
          %178 = sbr.rel (%p176) target = $region20
        $region19: #{tpu_custom_call.1} parent=11 // pred_region
          _
        $region20: #{tpu_custom_call.1} parent=11 // pred_fallthru
          _
        // Predicated region
        $region21: #{tpu_custom_call.1} parent=11 // pred_check
          %p179 = pneg %p132
        $region22: #{tpu_custom_call.1} parent=11 // pred_check_branch
          %181 = sbr.rel (%p179) target = $region24
        $region23: #{tpu_custom_call.1} parent=11 // pred_region
          _
        $region24: #{tpu_custom_call.1} parent=11 // pred_fallthru
          _
      $region12: #{tpu_custom_call.1} parent=5 // pred_fallthru
        _
      %p182 = scmp.lt.s32.totalorder %s17, 4
      // Predicated region
      $region25: #{tpu_custom_call.1} parent=5 // pred_check
        %p183 = pneg %p182
      $region26: #{tpu_custom_call.1} parent=5 // pred_check_branch
        %185 = sbr.rel (%p183) target = $region28
      $region27: #{tpu_custom_call.1} parent=5 // pred_region
        // Predicated region
        $region29: #{tpu_custom_call.1} parent=27 // pred_check
          %p186 = pneg %p37
        $region30: #{tpu_custom_call.1} parent=27 // pred_check_branch
          %188 = sbr.rel (%p186) target = $region32
        $region31: #{tpu_custom_call.1} parent=27 // pred_region
          %p189 = scmp.lt.s32.totalorder %s17, 3
          %s190 = scalar_select %p189, %s17, 3
          %s191 = smul.addr %s190, 16
          %s192 = smul.addr %s191, 8
          %s193 = scalar_lea.vmem %s0, %s192
        $region32: #{tpu_custom_call.1} parent=27 // pred_fallthru
          _
        // Predicated region
        $region33: #{tpu_custom_call.1} parent=27 // pred_check
          %p194 = pneg %p63
        $region34: #{tpu_custom_call.1} parent=27 // pred_check_branch
          %196 = sbr.rel (%p194) target = $region36
        $region35: #{tpu_custom_call.1} parent=27 // pred_region
          %s197 = sand.u32 %s53, 1
          %s198 = scalar_lea.sflag [#allocation3], %s197
          %s199 = sand.u32 %s53, 1
          %s200 = smul.addr %s199, 256
          %s201 = scalar_lea.vmem [#allocation2], %s200
          %s203 = ssub.s32 4096, 4096
          %204 = vsyncadd %s198, %s203
          %s205 = smul.addr %s17, 32
          %s206 = smul.addr %s205, 128
          %s207 = scalar_lea.hbm %s1, %s206
          %s208 = sshll.u32 %s201, 4
          %s209 = int_to_ptr.vmem [resolvable:$true] %s208
          %214 = dma.hbm_to_vmem [thread:$0]  %s207, 4096, %s209, %s198, 256, 256, 16
        $region36: #{tpu_custom_call.1} parent=27 // pred_fallthru
          _
      $region28: #{tpu_custom_call.1} parent=5 // pred_fallthru
        _
      %p215 = scmp.le.s32.totalorder 1, %s17
      %p216 = scmp.lt.s32.totalorder %s17, 5
      %p217 = pnand %p215, %p216
      %p218 = pneg %p217
      // Predicated region
      $region37: #{tpu_custom_call.1} parent=5 // pred_check
        _
      $region38: #{tpu_custom_call.1} parent=5 // pred_check_branch
        %220 = sbr.rel (%p217) target = $region40
      $region39: #{tpu_custom_call.1} parent=5 // pred_region
        %s221 = ssub.s32 %s17, 1
        %s222 = sand.u32 %s56, 1
        %s223 = scalar_lea.sflag [#allocation3], %s222
        %s224 = sand.u32 %s56, 1
        %s225 = smul.addr %s224, 256
        %s226 = scalar_lea.vmem [#allocation2], %s225
        // Predicated region
        $region41: #{tpu_custom_call.1} parent=39 // pred_check
          %p227 = pneg %p69
        $region42: #{tpu_custom_call.1} parent=39 // pred_check_branch
          %229 = sbr.rel (%p227) target = $region44
        $region43: #{tpu_custom_call.1} parent=39 // pred_region
          %230 = dma.done %s223, 4096
        $region44: #{tpu_custom_call.1} parent=39 // pred_fallthru
          _
        %p231 = scmp.lt.s32.totalorder %s22, 3
        %s232 = scalar_select %p231, %s22, 3
        %s233 = smul.addr %s232, 16
        %s234 = smul.addr %s233, 8
        %s235 = scalar_lea.vmem %s0, %s234
        %p236 = pneg %p43
        %p237 = pneg %p40
        %s238 = sand.u32 %s56, 1
        %s239 = scalar_lea.sflag [#allocation3], %s238
        %s240 = sand.u32 %s56, 1
        %s241 = smul.addr %s240, 256
        %s242 = scalar_lea.vmem [#allocation2], %s241
        %p243 = pneg %p69
        %p244 = pneg %p66
        %p245 = pneg %p90
        %p246 = pneg %p87
        %p247 = pneg %p111
        %p248 = pneg %p108
        %p249 = pneg %p132
        %p250 = pneg %p129
        %p251 = pneg %p158
        %p252 = pneg %p155
        %s253 = sand.u32 %s145, 1
        %s254 = scalar_lea.sflag [#allocation4], %s253
        %s255 = sand.u32 %s145, 1
        %s256 = smul.addr %s255, 128
        %s257 = scalar_lea.vmem [#allocation5], %s256
        %p258 = scmp.lt.s32.totalorder %s22, 3
        %s259 = scalar_select %p258, %s22, 3
        %s260 = smul.addr %s259, 16
        %s261 = smul.addr %s260, 8
        %s262 = scalar_lea.vmem %s0, %s261
        %v263 = vld [vmem:[%s262] sm:$0xff]
        %v264 = vld [vmem:[%s262 + $0x8] sm:$0xff]
        %v265 = vld [vmem:[%s262 + $0x10] sm:$0xff]
        %v266 = vld [vmem:[%s262 + $0x18] sm:$0xff]
        %v267 = vld [vmem:[%s262 + $0x20] sm:$0xff]
        %v268 = vld [vmem:[%s262 + $0x28] sm:$0xff]
        %v269 = vld [vmem:[%s262 + $0x30] sm:$0xff]
        %v270 = vld [vmem:[%s262 + $0x38] sm:$0xff]
        %v271 = vld [vmem:[%s262 + $0x40] sm:$0xff]
        %v272 = vld [vmem:[%s262 + $0x48] sm:$0xff]
        %v273 = vld [vmem:[%s262 + $0x50] sm:$0xff]
        %v274 = vld [vmem:[%s262 + $0x58] sm:$0xff]
        %v275 = vld [vmem:[%s262 + $0x60] sm:$0xff]
        %v276 = vld [vmem:[%s262 + $0x68] sm:$0xff]
        %v277 = vld [vmem:[%s262 + $0x70] sm:$0xff]
        %v278 = vld [vmem:[%s262 + $0x78] sm:$0xff]
        %v279 = vld [vmem:[%s2] sm:$0x1f]
        %v280 = vld [vmem:[%s2 + $0x8] sm:$0x1f]
        %v281 = vld [vmem:[%s2 + $0x10] sm:$0x1f]
        %vm282 = vcmask 39936
        %v284 = vsel %vm282, %v263, 0
        %v287 = vsel %vm282, %v264, 0
        %v290 = vsel %vm282, %v265, 0
        %v293 = vsel %vm282, %v266, 0
        %v296 = vsel %vm282, %v267, 0
        %v299 = vsel %vm282, %v268, 0
        %v302 = vsel %vm282, %v269, 0
        %v305 = vsel %vm282, %v270, 0
        %v308 = vsel %vm282, %v271, 0
        %v311 = vsel %vm282, %v272, 0
        %v314 = vsel %vm282, %v273, 0
        %v317 = vsel %vm282, %v274, 0
        %v320 = vsel %vm282, %v275, 0
        %v323 = vsel %vm282, %v276, 0
        %v326 = vsel %vm282, %v277, 0
        %v329 = vsel %vm282, %v278, 0
        %vm331 = vcmask 1044480
        %v333 = vsel %vm331, %v279, 0
        %v336 = vsel %vm331, %v280, 0
        %v339 = vsel %vm331, %v281, 0
        %341 = vmatprep.subr.mxu0 0.0
        %342 = vmatpush1.msra.mxu0 0.0
        %343 = vmatprep.subr.mxu0 0.0
        %344 = vmatpush1.msra.mxu0 0.0
        %345 = vmatprep.subr.mxu0 0.0
        %346 = vmatpush1.msra.mxu0 0.0
        %347 = vmatprep.subr.mxu0 0.0
        %348 = vmatpush1.msra.mxu0 0.0
        %349 = vmatprep.subr.mxu0 0.0
        %350 = vmatpush1.msra.mxu0 0.0
        %351 = vmatprep.subr.mxu0 0.0
        %352 = vmatpush1.msra.mxu0 0.0
        %353 = vmatprep.subr.mxu0 0.0
        %354 = vmatpush1.msra.mxu0 0.0
        %355 = vmatprep.subr.mxu0 0.0
        %356 = vmatpush1.msra.mxu0 0.0
        %357 = vmatprep.subr.mxu0 0.0
        %358 = vmatpush1.msra.mxu0 0.0
        %359 = vmatprep.subr.mxu0 0.0
        %360 = vmatpush1.msra.mxu0 0.0
        %361 = vmatprep.subr.mxu0 0.0
        %362 = vmatpush1.msra.mxu0 0.0
        %363 = vmatprep.subr.mxu0 0.0
        %364 = vmatpush1.msra.mxu0 0.0
        %365 = vmatprep.subr.mxu0 0.0
        %366 = vmatpush1.msra.mxu0 0.0
        %367 = vmatprep.subr.mxu0 0.0
        %368 = vmatpush1.msra.mxu0 0.0
        %369 = vmatprep.subr.mxu0 0.0
        %370 = vmatpush1.msra.mxu0 0.0
        %371 = vmatprep.subr.mxu0 %v336
        %372 = vmatpush1.msra.mxu0 %v333
        %373 = vmatprep.subr.mxu0 0.0
        %374 = vmatpush2.msra.mxu0 0.0
        %375 = vmatprep.subr.mxu0 0.0
        %376 = vmatpush2.msra.mxu0 0.0
        %377 = vmatprep.subr.mxu0 0.0
        %378 = vmatpush2.msra.mxu0 0.0
        %379 = vmatprep.subr.mxu0 0.0
        %380 = vmatpush2.msra.mxu0 0.0
        %381 = vmatprep.subr.mxu0 0.0
        %382 = vmatpush2.msra.mxu0 0.0
        %383 = vmatprep.subr.mxu0 0.0
        %384 = vmatpush2.msra.mxu0 0.0
        %385 = vmatprep.subr.mxu0 0.0
        %386 = vmatpush2.msra.mxu0 0.0
        %387 = vmatprep.subr.mxu0 0.0
        %388 = vmatpush2.msra.mxu0 0.0
        %389 = vmatprep.subr.mxu0 0.0
        %390 = vmatpush2.msra.mxu0 0.0
        %391 = vmatprep.subr.mxu0 0.0
        %392 = vmatpush2.msra.mxu0 0.0
        %393 = vmatprep.subr.mxu0 0.0
        %394 = vmatpush2.msra.mxu0 0.0
        %395 = vmatprep.subr.mxu0 0.0
        %396 = vmatpush2.msra.mxu0 0.0
        %397 = vmatprep.subr.mxu0 0.0
        %398 = vmatpush2.msra.mxu0 0.0
        %399 = vmatprep.subr.mxu0 0.0
        %400 = vmatpush2.msra.mxu0 0.0
        %401 = vmatprep.subr.mxu0 0.0
        %402 = vmatpush2.msra.mxu0 0.0
        %403 = vmatprep.subr.mxu0 0.0
        %404 = vmatpush2.msra.mxu0 0.0
        %405 = vmatprep.mubr.f32.mxu0 0.0
        %406 = vmatmul.mubr.f32.gmra.mxu0 %v284
        %v407 = vpop.f32.mrf.mxu0
        %v408 = vadd.f32 0.0, %v407
        %v409 = vpop.f32.mrf.mxu0
        %v410 = vadd.f32 0.0, %v409
        %411 = vmatprep.mubr.f32.mxu0 0.0
        %412 = vmatmul.mubr.f32.gmra.mxu0 %v287
        %v413 = vpop.f32.mrf.mxu0
        %v414 = vadd.f32 0.0, %v413
        %v415 = vpop.f32.mrf.mxu0
        %v416 = vadd.f32 0.0, %v415
        %417 = vmatprep.mubr.f32.mxu0 0.0
        %418 = vmatmul.mubr.f32.gmra.mxu0 %v290
        %v419 = vpop.f32.mrf.mxu0
        %v420 = vadd.f32 0.0, %v419
        %v421 = vpop.f32.mrf.mxu0
        %v422 = vadd.f32 0.0, %v421
        %423 = vmatprep.mubr.f32.mxu0 0.0
        %424 = vmatmul.mubr.f32.gmra.mxu0 %v293
        %v425 = vpop.f32.mrf.mxu0
        %v426 = vadd.f32 0.0, %v425
        %v427 = vpop.f32.mrf.mxu0
        %v428 = vadd.f32 0.0, %v427
        %429 = vmatprep.mubr.f32.mxu0 0.0
        %430 = vmatmul.mubr.f32.gmra.mxu0 %v296
        %v431 = vpop.f32.mrf.mxu0
        %v432 = vadd.f32 0.0, %v431
        %v433 = vpop.f32.mrf.mxu0
        %v434 = vadd.f32 0.0, %v433
        %435 = vmatprep.mubr.f32.mxu0 0.0
        %436 = vmatmul.mubr.f32.gmra.mxu0 %v299
        %v437 = vpop.f32.mrf.mxu0
        %v438 = vadd.f32 0.0, %v437
        %v439 = vpop.f32.mrf.mxu0
        %v440 = vadd.f32 0.0, %v439
        %441 = vmatprep.mubr.f32.mxu0 0.0
        %442 = vmatmul.mubr.f32.gmra.mxu0 %v302
        %v443 = vpop.f32.mrf.mxu0
        %v444 = vadd.f32 0.0, %v443
        %v445 = vpop.f32.mrf.mxu0
        %v446 = vadd.f32 0.0, %v445
        %447 = vmatprep.mubr.f32.mxu0 0.0
        %448 = vmatmul.mubr.f32.gmra.mxu0 %v305
        %v449 = vpop.f32.mrf.mxu0
        %v450 = vadd.f32 0.0, %v449
        %v451 = vpop.f32.mrf.mxu0
        %v452 = vadd.f32 0.0, %v451
        %453 = vmatprep.mubr.f32.mxu0 0.0
        %454 = vmatmul.mubr.f32.gmra.mxu0 %v308
        %v455 = vpop.f32.mrf.mxu0
        %v456 = vadd.f32 0.0, %v455
        %v457 = vpop.f32.mrf.mxu0
        %v458 = vadd.f32 0.0, %v457
        %459 = vmatprep.mubr.f32.mxu0 0.0
        %460 = vmatmul.mubr.f32.gmra.mxu0 %v311
        %v461 = vpop.f32.mrf.mxu0
        %v462 = vadd.f32 0.0, %v461
        %v463 = vpop.f32.mrf.mxu0
        %v464 = vadd.f32 0.0, %v463
        %465 = vmatprep.mubr.f32.mxu0 0.0
        %466 = vmatmul.mubr.f32.gmra.mxu0 %v314
        %v467 = vpop.f32.mrf.mxu0
        %v468 = vadd.f32 0.0, %v467
        %v469 = vpop.f32.mrf.mxu0
        %v470 = vadd.f32 0.0, %v469
        %471 = vmatprep.mubr.f32.mxu0 0.0
        %472 = vmatmul.mubr.f32.gmra.mxu0 %v317
        %v473 = vpop.f32.mrf.mxu0
        %v474 = vadd.f32 0.0, %v473
        %v475 = vpop.f32.mrf.mxu0
        %v476 = vadd.f32 0.0, %v475
        %477 = vmatprep.mubr.f32.mxu0 0.0
        %478 = vmatmul.mubr.f32.gmra.mxu0 %v320
        %v479 = vpop.f32.mrf.mxu0
        %v480 = vadd.f32 0.0, %v479
        %v481 = vpop.f32.mrf.mxu0
        %v482 = vadd.f32 0.0, %v481
        %483 = vmatprep.mubr.f32.mxu0 0.0
        %484 = vmatmul.mubr.f32.gmra.mxu0 %v323
        %v485 = vpop.f32.mrf.mxu0
        %v486 = vadd.f32 0.0, %v485
        %v487 = vpop.f32.mrf.mxu0
        %v488 = vadd.f32 0.0, %v487
        %489 = vmatprep.mubr.f32.mxu0 0.0
        %490 = vmatmul.mubr.f32.gmra.mxu0 %v326
        %v491 = vpop.f32.mrf.mxu0
        %v492 = vadd.f32 0.0, %v491
        %v493 = vpop.f32.mrf.mxu0
        %v494 = vadd.f32 0.0, %v493
        %495 = vmatprep.mubr.f32.mxu0 0.0
        %496 = vmatmul.mubr.f32.gmra.mxu0 %v329
        %v497 = vpop.f32.mrf.mxu0
        %v498 = vadd.f32 0.0, %v497
        %v499 = vpop.f32.mrf.mxu0
        %v500 = vadd.f32 0.0, %v499
        %501 = vdwg.mxu0
        %502 = vmatprep.subr.mxu0 0.0
        %503 = vmatpush1.msra.mxu0 0.0
        %504 = vmatprep.subr.mxu0 0.0
        %505 = vmatpush1.msra.mxu0 0.0
        %506 = vmatprep.subr.mxu0 0.0
        %507 = vmatpush1.msra.mxu0 0.0
        %508 = vmatprep.subr.mxu0 0.0
        %509 = vmatpush1.msra.mxu0 0.0
        %510 = vmatprep.subr.mxu0 0.0
        %511 = vmatpush1.msra.mxu0 0.0
        %512 = vmatprep.subr.mxu0 0.0
        %513 = vmatpush1.msra.mxu0 0.0
        %514 = vmatprep.subr.mxu0 0.0
        %515 = vmatpush1.msra.mxu0 0.0
        %516 = vmatprep.subr.mxu0 0.0
        %517 = vmatpush1.msra.mxu0 0.0
        %518 = vmatprep.subr.mxu0 0.0
        %519 = vmatpush1.msra.mxu0 0.0
        %520 = vmatprep.subr.mxu0 0.0
        %521 = vmatpush1.msra.mxu0 0.0
        %522 = vmatprep.subr.mxu0 0.0
        %523 = vmatpush1.msra.mxu0 0.0
        %524 = vmatprep.subr.mxu0 0.0
        %525 = vmatpush1.msra.mxu0 0.0
        %526 = vmatprep.subr.mxu0 0.0
        %527 = vmatpush1.msra.mxu0 0.0
        %528 = vmatprep.subr.mxu0 0.0
        %529 = vmatpush1.msra.mxu0 0.0
        %530 = vmatprep.subr.mxu0 0.0
        %531 = vmatpush1.msra.mxu0 0.0
        %532 = vmatprep.subr.mxu0 0.0
        %533 = vmatpush1.msra.mxu0 %v339
        %534 = vmatprep.subr.mxu0 0.0
        %535 = vmatpush2.msra.mxu0 0.0
        %536 = vmatprep.subr.mxu0 0.0
        %537 = vmatpush2.msra.mxu0 0.0
        %538 = vmatprep.subr.mxu0 0.0
        %539 = vmatpush2.msra.mxu0 0.0
        %540 = vmatprep.subr.mxu0 0.0
        %541 = vmatpush2.msra.mxu0 0.0
        %542 = vmatprep.subr.mxu0 0.0
        %543 = vmatpush2.msra.mxu0 0.0
        %544 = vmatprep.subr.mxu0 0.0
        %545 = vmatpush2.msra.mxu0 0.0
        %546 = vmatprep.subr.mxu0 0.0
        %547 = vmatpush2.msra.mxu0 0.0
        %548 = vmatprep.subr.mxu0 0.0
        %549 = vmatpush2.msra.mxu0 0.0
        %550 = vmatprep.subr.mxu0 0.0
        %551 = vmatpush2.msra.mxu0 0.0
        %552 = vmatprep.subr.mxu0 0.0
        %553 = vmatpush2.msra.mxu0 0.0
        %554 = vmatprep.subr.mxu0 0.0
        %555 = vmatpush2.msra.mxu0 0.0
        %556 = vmatprep.subr.mxu0 0.0
        %557 = vmatpush2.msra.mxu0 0.0
        %558 = vmatprep.subr.mxu0 0.0
        %559 = vmatpush2.msra.mxu0 0.0
        %560 = vmatprep.subr.mxu0 0.0
        %561 = vmatpush2.msra.mxu0 0.0
        %562 = vmatprep.subr.mxu0 0.0
        %563 = vmatpush2.msra.mxu0 0.0
        %564 = vmatprep.subr.mxu0 0.0
        %565 = vmatpush2.msra.mxu0 0.0
        %566 = vmatprep.mubr.f32.mxu0 0.0
        %567 = vmatmul.mubr.f32.gmra.mxu0 %v284
        %v568 = vpop.f32.mrf.mxu0
        %v569 = vadd.f32 0.0, %v568
        %v570 = vpop.f32.mrf.mxu0
        %571 = vmatprep.mubr.f32.mxu0 0.0
        %572 = vmatmul.mubr.f32.gmra.mxu0 %v287
        %v573 = vpop.f32.mrf.mxu0
        %v574 = vadd.f32 0.0, %v573
        %v575 = vpop.f32.mrf.mxu0
        %576 = vmatprep.mubr.f32.mxu0 0.0
        %577 = vmatmul.mubr.f32.gmra.mxu0 %v290
        %v578 = vpop.f32.mrf.mxu0
        %v579 = vadd.f32 0.0, %v578
        %v580 = vpop.f32.mrf.mxu0
        %581 = vmatprep.mubr.f32.mxu0 0.0
        %582 = vmatmul.mubr.f32.gmra.mxu0 %v293
        %v583 = vpop.f32.mrf.mxu0
        %v584 = vadd.f32 0.0, %v583
        %v585 = vpop.f32.mrf.mxu0
        %586 = vmatprep.mubr.f32.mxu0 0.0
        %587 = vmatmul.mubr.f32.gmra.mxu0 %v296
        %v588 = vpop.f32.mrf.mxu0
        %v589 = vadd.f32 0.0, %v588
        %v590 = vpop.f32.mrf.mxu0
        %591 = vmatprep.mubr.f32.mxu0 0.0
        %592 = vmatmul.mubr.f32.gmra.mxu0 %v299
        %v593 = vpop.f32.mrf.mxu0
        %v594 = vadd.f32 0.0, %v593
        %v595 = vpop.f32.mrf.mxu0
        %596 = vmatprep.mubr.f32.mxu0 0.0
        %597 = vmatmul.mubr.f32.gmra.mxu0 %v302
        %v598 = vpop.f32.mrf.mxu0
        %v599 = vadd.f32 0.0, %v598
        %v600 = vpop.f32.mrf.mxu0
        %601 = vmatprep.mubr.f32.mxu0 0.0
        %602 = vmatmul.mubr.f32.gmra.mxu0 %v305
        %v603 = vpop.f32.mrf.mxu0
        %v604 = vadd.f32 0.0, %v603
        %v605 = vpop.f32.mrf.mxu0
        %606 = vmatprep.mubr.f32.mxu0 0.0
        %607 = vmatmul.mubr.f32.gmra.mxu0 %v308
        %v608 = vpop.f32.mrf.mxu0
        %v609 = vadd.f32 0.0, %v608
        %v610 = vpop.f32.mrf.mxu0
        %611 = vmatprep.mubr.f32.mxu0 0.0
        %612 = vmatmul.mubr.f32.gmra.mxu0 %v311
        %v613 = vpop.f32.mrf.mxu0
        %v614 = vadd.f32 0.0, %v613
        %v615 = vpop.f32.mrf.mxu0
        %616 = vmatprep.mubr.f32.mxu0 0.0
        %617 = vmatmul.mubr.f32.gmra.mxu0 %v314
        %v618 = vpop.f32.mrf.mxu0
        %v619 = vadd.f32 0.0, %v618
        %v620 = vpop.f32.mrf.mxu0
        %621 = vmatprep.mubr.f32.mxu0 0.0
        %622 = vmatmul.mubr.f32.gmra.mxu0 %v317
        %v623 = vpop.f32.mrf.mxu0
        %v624 = vadd.f32 0.0, %v623
        %v625 = vpop.f32.mrf.mxu0
        %626 = vmatprep.mubr.f32.mxu0 0.0
        %627 = vmatmul.mubr.f32.gmra.mxu0 %v320
        %v628 = vpop.f32.mrf.mxu0
        %v629 = vadd.f32 0.0, %v628
        %v630 = vpop.f32.mrf.mxu0
        %631 = vmatprep.mubr.f32.mxu0 0.0
        %632 = vmatmul.mubr.f32.gmra.mxu0 %v323
        %v633 = vpop.f32.mrf.mxu0
        %v634 = vadd.f32 0.0, %v633
        %v635 = vpop.f32.mrf.mxu0
        %636 = vmatprep.mubr.f32.mxu0 0.0
        %637 = vmatmul.mubr.f32.gmra.mxu0 %v326
        %v638 = vpop.f32.mrf.mxu0
        %v639 = vadd.f32 0.0, %v638
        %v640 = vpop.f32.mrf.mxu0
        %641 = vmatprep.mubr.f32.mxu0 0.0
        %642 = vmatmul.mubr.f32.gmra.mxu0 %v329
        %v643 = vpop.f32.mrf.mxu0
        %v644 = vadd.f32 0.0, %v643
        %v645 = vpop.f32.mrf.mxu0
        %646 = vdwg.mxu0
        %v647 = vld [vmem:[%s226] sm:$0xff]
        %v648 = vld [vmem:[%s226 + $0x8] sm:$0xff]
        %v649 = vld [vmem:[%s226 + $0x10] sm:$0xff]
        %v650 = vld [vmem:[%s226 + $0x18] sm:$0xff]
        %v651 = vld [vmem:[%s226 + $0x20] sm:$0xff]
        %v652 = vld [vmem:[%s226 + $0x28] sm:$0xff]
        %v653 = vld [vmem:[%s226 + $0x30] sm:$0xff]
        %v654 = vld [vmem:[%s226 + $0x38] sm:$0xff]
        %v655 = vld [vmem:[%s226 + $0x40] sm:$0xff]
        %v656 = vld [vmem:[%s226 + $0x48] sm:$0xff]
        %v657 = vld [vmem:[%s226 + $0x50] sm:$0xff]
        %v658 = vld [vmem:[%s226 + $0x58] sm:$0xff]
        %v659 = vld [vmem:[%s226 + $0x60] sm:$0xff]
        %v660 = vld [vmem:[%s226 + $0x68] sm:$0xff]
        %v661 = vld [vmem:[%s226 + $0x70] sm:$0xff]
        %v662 = vld [vmem:[%s226 + $0x78] sm:$0xff]
        %v663 = vld [vmem:[%s226 + $0x80] sm:$0xff]
        %v664 = vld [vmem:[%s226 + $0x88] sm:$0xff]
        %v665 = vld [vmem:[%s226 + $0x90] sm:$0xff]
        %v666 = vld [vmem:[%s226 + $0x98] sm:$0xff]
        %v667 = vld [vmem:[%s226 + $0xa0] sm:$0xff]
        %v668 = vld [vmem:[%s226 + $0xa8] sm:$0xff]
        %v669 = vld [vmem:[%s226 + $0xb0] sm:$0xff]
        %v670 = vld [vmem:[%s226 + $0xb8] sm:$0xff]
        %v671 = vld [vmem:[%s226 + $0xc0] sm:$0xff]
        %v672 = vld [vmem:[%s226 + $0xc8] sm:$0xff]
        %v673 = vld [vmem:[%s226 + $0xd0] sm:$0xff]
        %v674 = vld [vmem:[%s226 + $0xd8] sm:$0xff]
        %v675 = vld [vmem:[%s226 + $0xe0] sm:$0xff]
        %v676 = vld [vmem:[%s226 + $0xe8] sm:$0xff]
        %v677 = vld [vmem:[%s226 + $0xf0] sm:$0xff]
        %v678 = vld [vmem:[%s226 + $0xf8] sm:$0xff]
        %679 = vmatprep.subr.mxu0 0.0
        %680 = vmatpush1.msra.mxu0 %v500
        %681 = vmatprep.subr.mxu0 0.0
        %682 = vmatpush1.msra.mxu0 %v494
        %683 = vmatprep.subr.mxu0 0.0
        %684 = vmatpush1.msra.mxu0 %v488
        %685 = vmatprep.subr.mxu0 0.0
        %686 = vmatpush1.msra.mxu0 %v482
        %687 = vmatprep.subr.mxu0 0.0
        %688 = vmatpush1.msra.mxu0 %v476
        %689 = vmatprep.subr.mxu0 0.0
        %690 = vmatpush1.msra.mxu0 %v470
        %691 = vmatprep.subr.mxu0 0.0
        %692 = vmatpush1.msra.mxu0 %v464
        %693 = vmatprep.subr.mxu0 0.0
        %694 = vmatpush1.msra.mxu0 %v458
        %695 = vmatprep.subr.mxu0 0.0
        %696 = vmatpush1.msra.mxu0 %v452
        %697 = vmatprep.subr.mxu0 0.0
        %698 = vmatpush1.msra.mxu0 %v446
        %699 = vmatprep.subr.mxu0 0.0
        %700 = vmatpush1.msra.mxu0 %v440
        %701 = vmatprep.subr.mxu0 0.0
        %702 = vmatpush1.msra.mxu0 %v434
        %703 = vmatprep.subr.mxu0 0.0
        %704 = vmatpush1.msra.mxu0 %v428
        %705 = vmatprep.subr.mxu0 0.0
        %706 = vmatpush1.msra.mxu0 %v422
        %707 = vmatprep.subr.mxu0 0.0
        %708 = vmatpush1.msra.mxu0 %v416
        %709 = vmatprep.subr.mxu0 0.0
        %710 = vmatpush1.msra.mxu0 %v410
        %711 = vmatprep.subr.mxu0 0.0
        %712 = vmatpush2.msra.mxu0 %v644
        %713 = vmatprep.subr.mxu0 0.0
        %714 = vmatpush2.msra.mxu0 %v639
        %715 = vmatprep.subr.mxu0 0.0
        %716 = vmatpush2.msra.mxu0 %v634
        %717 = vmatprep.subr.mxu0 0.0
        %718 = vmatpush2.msra.mxu0 %v629
        %719 = vmatprep.subr.mxu0 0.0
        %720 = vmatpush2.msra.mxu0 %v624
        %721 = vmatprep.subr.mxu0 0.0
        %722 = vmatpush2.msra.mxu0 %v619
        %723 = vmatprep.subr.mxu0 0.0
        %724 = vmatpush2.msra.mxu0 %v614
        %725 = vmatprep.subr.mxu0 0.0
        %726 = vmatpush2.msra.mxu0 %v609
        %727 = vmatprep.subr.mxu0 0.0
        %728 = vmatpush2.msra.mxu0 %v604
        %729 = vmatprep.subr.mxu0 0.0
        %730 = vmatpush2.msra.mxu0 %v599
        %731 = vmatprep.subr.mxu0 0.0
        %732 = vmatpush2.msra.mxu0 %v594
        %733 = vmatprep.subr.mxu0 0.0
        %734 = vmatpush2.msra.mxu0 %v589
        %735 = vmatprep.subr.mxu0 0.0
        %736 = vmatpush2.msra.mxu0 %v584
        %737 = vmatprep.subr.mxu0 0.0
        %738 = vmatpush2.msra.mxu0 %v579
        %739 = vmatprep.subr.mxu0 0.0
        %740 = vmatpush2.msra.mxu0 %v574
        %741 = vmatprep.subr.mxu0 0.0
        %742 = vmatpush2.msra.mxu0 %v569
        %743 = vmatprep.mubr.f32.mxu0 %v648
        %744 = vmatmul.mubr.f32.gmra.mxu0 %v647
        %v745 = vpop.f32.mrf.mxu0
        %v746 = vadd.f32 0.0, %v745
        %v747 = vpop.f32.mrf.mxu0
        %748 = vmatprep.mubr.f32.mxu0 %v650
        %749 = vmatmul.mubr.f32.gmra.mxu0 %v649
        %v750 = vpop.f32.mrf.mxu0
        %v751 = vadd.f32 0.0, %v750
        %v752 = vpop.f32.mrf.mxu0
        %753 = vmatprep.mubr.f32.mxu0 %v652
        %754 = vmatmul.mubr.f32.gmra.mxu0 %v651
        %v755 = vpop.f32.mrf.mxu0
        %v756 = vadd.f32 0.0, %v755
        %v757 = vpop.f32.mrf.mxu0
        %758 = vmatprep.mubr.f32.mxu0 %v654
        %759 = vmatmul.mubr.f32.gmra.mxu0 %v653
        %v760 = vpop.f32.mrf.mxu0
        %v761 = vadd.f32 0.0, %v760
        %v762 = vpop.f32.mrf.mxu0
        %763 = vmatprep.mubr.f32.mxu0 %v656
        %764 = vmatmul.mubr.f32.gmra.mxu0 %v655
        %v765 = vpop.f32.mrf.mxu0
        %v766 = vadd.f32 0.0, %v765
        %v767 = vpop.f32.mrf.mxu0
        %768 = vmatprep.mubr.f32.mxu0 %v658
        %769 = vmatmul.mubr.f32.gmra.mxu0 %v657
        %v770 = vpop.f32.mrf.mxu0
        %v771 = vadd.f32 0.0, %v770
        %v772 = vpop.f32.mrf.mxu0
        %773 = vmatprep.mubr.f32.mxu0 %v660
        %774 = vmatmul.mubr.f32.gmra.mxu0 %v659
        %v775 = vpop.f32.mrf.mxu0
        %v776 = vadd.f32 0.0, %v775
        %v777 = vpop.f32.mrf.mxu0
        %778 = vmatprep.mubr.f32.mxu0 %v662
        %779 = vmatmul.mubr.f32.gmra.mxu0 %v661
        %v780 = vpop.f32.mrf.mxu0
        %v781 = vadd.f32 0.0, %v780
        %v782 = vpop.f32.mrf.mxu0
        %783 = vmatprep.mubr.f32.mxu0 %v664
        %784 = vmatmul.mubr.f32.gmra.mxu0 %v663
        %v785 = vpop.f32.mrf.mxu0
        %v786 = vadd.f32 0.0, %v785
        %v787 = vpop.f32.mrf.mxu0
        %788 = vmatprep.mubr.f32.mxu0 %v666
        %789 = vmatmul.mubr.f32.gmra.mxu0 %v665
        %v790 = vpop.f32.mrf.mxu0
        %v791 = vadd.f32 0.0, %v790
        %v792 = vpop.f32.mrf.mxu0
        %793 = vmatprep.mubr.f32.mxu0 %v668
        %794 = vmatmul.mubr.f32.gmra.mxu0 %v667
        %v795 = vpop.f32.mrf.mxu0
        %v796 = vadd.f32 0.0, %v795
        %v797 = vpop.f32.mrf.mxu0
        %798 = vmatprep.mubr.f32.mxu0 %v670
        %799 = vmatmul.mubr.f32.gmra.mxu0 %v669
        %v800 = vpop.f32.mrf.mxu0
        %v801 = vadd.f32 0.0, %v800
        %v802 = vpop.f32.mrf.mxu0
        %803 = vmatprep.mubr.f32.mxu0 %v672
        %804 = vmatmul.mubr.f32.gmra.mxu0 %v671
        %v805 = vpop.f32.mrf.mxu0
        %v806 = vadd.f32 0.0, %v805
        %v807 = vpop.f32.mrf.mxu0
        %808 = vmatprep.mubr.f32.mxu0 %v674
        %809 = vmatmul.mubr.f32.gmra.mxu0 %v673
        %v810 = vpop.f32.mrf.mxu0
        %v811 = vadd.f32 0.0, %v810
        %v812 = vpop.f32.mrf.mxu0
        %813 = vmatprep.mubr.f32.mxu0 %v676
        %814 = vmatmul.mubr.f32.gmra.mxu0 %v675
        %v815 = vpop.f32.mrf.mxu0
        %v816 = vadd.f32 0.0, %v815
        %v817 = vpop.f32.mrf.mxu0
        %818 = vmatprep.mubr.f32.mxu0 %v678
        %819 = vmatmul.mubr.f32.gmra.mxu0 %v677
        %v820 = vpop.f32.mrf.mxu0
        %v821 = vadd.f32 0.0, %v820
        %v822 = vpop.f32.mrf.mxu0
        %823 = vdwg.mxu0
        %v824 = vadd.f32 %v408, %v746
        %v825 = vadd.f32 %v414, %v751
        %v826 = vadd.f32 %v420, %v756
        %v827 = vadd.f32 %v426, %v761
        %v828 = vadd.f32 %v432, %v766
        %v829 = vadd.f32 %v438, %v771
        %v830 = vadd.f32 %v444, %v776
        %v831 = vadd.f32 %v450, %v781
        %v832 = vadd.f32 %v456, %v786
        %v833 = vadd.f32 %v462, %v791
        %v834 = vadd.f32 %v468, %v796
        %v835 = vadd.f32 %v474, %v801
        %v836 = vadd.f32 %v480, %v806
        %v837 = vadd.f32 %v486, %v811
        %v838 = vadd.f32 %v492, %v816
        %v839 = vadd.f32 %v498, %v821
        %v840 = vmax.f32 %v824, 0.0
        %v841 = vmax.f32 %v825, 0.0
        %v842 = vmax.f32 %v826, 0.0
        %v843 = vmax.f32 %v827, 0.0
        %v844 = vmax.f32 %v828, 0.0
        %v845 = vmax.f32 %v829, 0.0
        %v846 = vmax.f32 %v830, 0.0
        %v847 = vmax.f32 %v831, 0.0
        %v848 = vmax.f32 %v832, 0.0
        %v849 = vmax.f32 %v833, 0.0
        %v850 = vmax.f32 %v834, 0.0
        %v851 = vmax.f32 %v835, 0.0
        %v852 = vmax.f32 %v836, 0.0
        %v853 = vmax.f32 %v837, 0.0
        %v854 = vmax.f32 %v838, 0.0
        %v855 = vmax.f32 %v839, 0.0
        %v856 = vld [vmem:[%s3] sm:$0xff]
        %v857 = vld [vmem:[%s3 + $0x8] sm:$0xff]
        %v858 = vld [vmem:[%s3 + $0x10] sm:$0xff]
        %v859 = vld [vmem:[%s3 + $0x18] sm:$0xff]
        %v860 = vld [vmem:[%s3 + $0x20] sm:$0xff]
        %v861 = vld [vmem:[%s3 + $0x28] sm:$0xff]
        %v862 = vld [vmem:[%s3 + $0x30] sm:$0xff]
        %v863 = vld [vmem:[%s3 + $0x38] sm:$0xff]
        %v864 = vld [vmem:[%s3 + $0x40] sm:$0xff]
        %v865 = vld [vmem:[%s3 + $0x48] sm:$0xff]
        %v866 = vld [vmem:[%s3 + $0x50] sm:$0xff]
        %v867 = vld [vmem:[%s3 + $0x58] sm:$0xff]
        %v868 = vld [vmem:[%s3 + $0x60] sm:$0xff]
        %v869 = vld [vmem:[%s3 + $0x68] sm:$0xff]
        %v870 = vld [vmem:[%s3 + $0x70] sm:$0xff]
        %v871 = vld [vmem:[%s3 + $0x78] sm:$0xff]
        %v872 = vld [vmem:[%s3 + $0x80] sm:$0xff]
        %v873 = vld [vmem:[%s3 + $0x88] sm:$0xff]
        %v874 = vld [vmem:[%s3 + $0x90] sm:$0xff]
        %v875 = vld [vmem:[%s3 + $0x98] sm:$0xff]
        %v876 = vld [vmem:[%s3 + $0xa0] sm:$0xff]
        %v877 = vld [vmem:[%s3 + $0xa8] sm:$0xff]
        %v878 = vld [vmem:[%s3 + $0xb0] sm:$0xff]
        %v879 = vld [vmem:[%s3 + $0xb8] sm:$0xff]
        %v880 = vld [vmem:[%s3 + $0xc0] sm:$0xff]
        %v881 = vld [vmem:[%s3 + $0xc8] sm:$0xff]
        %v882 = vld [vmem:[%s3 + $0xd0] sm:$0xff]
        %v883 = vld [vmem:[%s3 + $0xd8] sm:$0xff]
        %v884 = vld [vmem:[%s3 + $0xe0] sm:$0xff]
        %v885 = vld [vmem:[%s3 + $0xe8] sm:$0xff]
        %v886 = vld [vmem:[%s3 + $0xf0] sm:$0xff]
        %v887 = vld [vmem:[%s3 + $0xf8] sm:$0xff]
        %v888 = vld [vmem:[%s3 + $0x100] sm:$0xff]
        %v889 = vld [vmem:[%s3 + $0x108] sm:$0xff]
        %v890 = vld [vmem:[%s3 + $0x110] sm:$0xff]
        %v891 = vld [vmem:[%s3 + $0x118] sm:$0xff]
        %v892 = vld [vmem:[%s3 + $0x120] sm:$0xff]
        %v893 = vld [vmem:[%s3 + $0x128] sm:$0xff]
        %v894 = vld [vmem:[%s3 + $0x130] sm:$0xff]
        %v895 = vld [vmem:[%s3 + $0x138] sm:$0xff]
        %v896 = vld [vmem:[%s3 + $0x140] sm:$0xff]
        %v897 = vld [vmem:[%s3 + $0x148] sm:$0xff]
        %v898 = vld [vmem:[%s3 + $0x150] sm:$0xff]
        %v899 = vld [vmem:[%s3 + $0x158] sm:$0xff]
        %v900 = vld [vmem:[%s3 + $0x160] sm:$0xff]
        %v901 = vld [vmem:[%s3 + $0x168] sm:$0xff]
        %v902 = vld [vmem:[%s3 + $0x170] sm:$0xff]
        %v903 = vld [vmem:[%s3 + $0x178] sm:$0xff]
        %904 = vmatprep.subr.mxu0 %v902
        %905 = vmatpush1.msra.mxu0 %v901
        %906 = vmatprep.subr.mxu0 %v899
        %907 = vmatpush1.msra.mxu0 %v898
        %908 = vmatprep.subr.mxu0 %v896
        %909 = vmatpush1.msra.mxu0 %v895
        %910 = vmatprep.subr.mxu0 %v893
        %911 = vmatpush1.msra.mxu0 %v892
        %912 = vmatprep.subr.mxu0 %v890
        %913 = vmatpush1.msra.mxu0 %v889
        %914 = vmatprep.subr.mxu0 %v887
        %915 = vmatpush1.msra.mxu0 %v886
        %916 = vmatprep.subr.mxu0 %v884
        %917 = vmatpush1.msra.mxu0 %v883
        %918 = vmatprep.subr.mxu0 %v881
        %919 = vmatpush1.msra.mxu0 %v880
        %920 = vmatprep.subr.mxu0 %v878
        %921 = vmatpush1.msra.mxu0 %v877
        %922 = vmatprep.subr.mxu0 %v875
        %923 = vmatpush1.msra.mxu0 %v874
        %924 = vmatprep.subr.mxu0 %v872
        %925 = vmatpush1.msra.mxu0 %v871
        %926 = vmatprep.subr.mxu0 %v869
        %927 = vmatpush1.msra.mxu0 %v868
        %928 = vmatprep.subr.mxu0 %v866
        %929 = vmatpush1.msra.mxu0 %v865
        %930 = vmatprep.subr.mxu0 %v863
        %931 = vmatpush1.msra.mxu0 %v862
        %932 = vmatprep.subr.mxu0 %v860
        %933 = vmatpush1.msra.mxu0 %v859
        %934 = vmatprep.subr.mxu0 %v857
        %935 = vmatpush1.msra.mxu0 %v856
        %936 = vmatprep.subr.mxu0 0.0
        %937 = vmatpush2.msra.mxu0 0.0
        %938 = vmatprep.subr.mxu0 0.0
        %939 = vmatpush2.msra.mxu0 0.0
        %940 = vmatprep.subr.mxu0 0.0
        %941 = vmatpush2.msra.mxu0 0.0
        %942 = vmatprep.subr.mxu0 0.0
        %943 = vmatpush2.msra.mxu0 0.0
        %944 = vmatprep.subr.mxu0 0.0
        %945 = vmatpush2.msra.mxu0 0.0
        %946 = vmatprep.subr.mxu0 0.0
        %947 = vmatpush2.msra.mxu0 0.0
        %948 = vmatprep.subr.mxu0 0.0
        %949 = vmatpush2.msra.mxu0 0.0
        %950 = vmatprep.subr.mxu0 0.0
        %951 = vmatpush2.msra.mxu0 0.0
        %952 = vmatprep.subr.mxu0 0.0
        %953 = vmatpush2.msra.mxu0 0.0
        %954 = vmatprep.subr.mxu0 0.0
        %955 = vmatpush2.msra.mxu0 0.0
        %956 = vmatprep.subr.mxu0 0.0
        %957 = vmatpush2.msra.mxu0 0.0
        %958 = vmatprep.subr.mxu0 0.0
        %959 = vmatpush2.msra.mxu0 0.0
        %960 = vmatprep.subr.mxu0 0.0
        %961 = vmatpush2.msra.mxu0 0.0
        %962 = vmatprep.subr.mxu0 0.0
        %963 = vmatpush2.msra.mxu0 0.0
        %964 = vmatprep.subr.mxu0 0.0
        %965 = vmatpush2.msra.mxu0 0.0
        %966 = vmatprep.subr.mxu0 0.0
        %967 = vmatpush2.msra.mxu0 0.0
        %968 = vmatprep.mubr.f32.mxu0 0.0
        %969 = vmatmul.mubr.f32.gmra.mxu0 %v840
        %v970 = vpop.f32.mrf.mxu0
        %v971 = vadd.f32 0.0, %v970
        %v972 = vpop.f32.mrf.mxu0
        %v973 = vadd.f32 0.0, %v972
        %974 = vmatprep.mubr.f32.mxu0 0.0
        %975 = vmatmul.mubr.f32.gmra.mxu0 %v841
        %v976 = vpop.f32.mrf.mxu0
        %v977 = vadd.f32 0.0, %v976
        %v978 = vpop.f32.mrf.mxu0
        %v979 = vadd.f32 0.0, %v978
        %980 = vmatprep.mubr.f32.mxu0 0.0
        %981 = vmatmul.mubr.f32.gmra.mxu0 %v842
        %v982 = vpop.f32.mrf.mxu0
        %v983 = vadd.f32 0.0, %v982
        %v984 = vpop.f32.mrf.mxu0
        %v985 = vadd.f32 0.0, %v984
        %986 = vmatprep.mubr.f32.mxu0 0.0
        %987 = vmatmul.mubr.f32.gmra.mxu0 %v843
        %v988 = vpop.f32.mrf.mxu0
        %v989 = vadd.f32 0.0, %v988
        %v990 = vpop.f32.mrf.mxu0
        %v991 = vadd.f32 0.0, %v990
        %992 = vmatprep.mubr.f32.mxu0 0.0
        %993 = vmatmul.mubr.f32.gmra.mxu0 %v844
        %v994 = vpop.f32.mrf.mxu0
        %v995 = vadd.f32 0.0, %v994
        %v996 = vpop.f32.mrf.mxu0
        %v997 = vadd.f32 0.0, %v996
        %998 = vmatprep.mubr.f32.mxu0 0.0
        %999 = vmatmul.mubr.f32.gmra.mxu0 %v845
        %v1000 = vpop.f32.mrf.mxu0
        %v1001 = vadd.f32 0.0, %v1000
        %v1002 = vpop.f32.mrf.mxu0
        %v1003 = vadd.f32 0.0, %v1002
        %1004 = vmatprep.mubr.f32.mxu0 0.0
        %1005 = vmatmul.mubr.f32.gmra.mxu0 %v846
        %v1006 = vpop.f32.mrf.mxu0
        %v1007 = vadd.f32 0.0, %v1006
        %v1008 = vpop.f32.mrf.mxu0
        %v1009 = vadd.f32 0.0, %v1008
        %1010 = vmatprep.mubr.f32.mxu0 0.0
        %1011 = vmatmul.mubr.f32.gmra.mxu0 %v847
        %v1012 = vpop.f32.mrf.mxu0
        %v1013 = vadd.f32 0.0, %v1012
        %v1014 = vpop.f32.mrf.mxu0
        %v1015 = vadd.f32 0.0, %v1014
        %1016 = vmatprep.mubr.f32.mxu0 0.0
        %1017 = vmatmul.mubr.f32.gmra.mxu0 %v848
        %v1018 = vpop.f32.mrf.mxu0
        %v1019 = vadd.f32 0.0, %v1018
        %v1020 = vpop.f32.mrf.mxu0
        %v1021 = vadd.f32 0.0, %v1020
        %1022 = vmatprep.mubr.f32.mxu0 0.0
        %1023 = vmatmul.mubr.f32.gmra.mxu0 %v849
        %v1024 = vpop.f32.mrf.mxu0
        %v1025 = vadd.f32 0.0, %v1024
        %v1026 = vpop.f32.mrf.mxu0
        %v1027 = vadd.f32 0.0, %v1026
        %1028 = vmatprep.mubr.f32.mxu0 0.0
        %1029 = vmatmul.mubr.f32.gmra.mxu0 %v850
        %v1030 = vpop.f32.mrf.mxu0
        %v1031 = vadd.f32 0.0, %v1030
        %v1032 = vpop.f32.mrf.mxu0
        %v1033 = vadd.f32 0.0, %v1032
        %1034 = vmatprep.mubr.f32.mxu0 0.0
        %1035 = vmatmul.mubr.f32.gmra.mxu0 %v851
        %v1036 = vpop.f32.mrf.mxu0
        %v1037 = vadd.f32 0.0, %v1036
        %v1038 = vpop.f32.mrf.mxu0
        %v1039 = vadd.f32 0.0, %v1038
        %1040 = vmatprep.mubr.f32.mxu0 0.0
        %1041 = vmatmul.mubr.f32.gmra.mxu0 %v852
        %v1042 = vpop.f32.mrf.mxu0
        %v1043 = vadd.f32 0.0, %v1042
        %v1044 = vpop.f32.mrf.mxu0
        %v1045 = vadd.f32 0.0, %v1044
        %1046 = vmatprep.mubr.f32.mxu0 0.0
        %1047 = vmatmul.mubr.f32.gmra.mxu0 %v853
        %v1048 = vpop.f32.mrf.mxu0
        %v1049 = vadd.f32 0.0, %v1048
        %v1050 = vpop.f32.mrf.mxu0
        %v1051 = vadd.f32 0.0, %v1050
        %1052 = vmatprep.mubr.f32.mxu0 0.0
        %1053 = vmatmul.mubr.f32.gmra.mxu0 %v854
        %v1054 = vpop.f32.mrf.mxu0
        %v1055 = vadd.f32 0.0, %v1054
        %v1056 = vpop.f32.mrf.mxu0
        %v1057 = vadd.f32 0.0, %v1056
        %1058 = vmatprep.mubr.f32.mxu0 0.0
        %1059 = vmatmul.mubr.f32.gmra.mxu0 %v855
        %v1060 = vpop.f32.mrf.mxu0
        %v1061 = vadd.f32 0.0, %v1060
        %v1062 = vpop.f32.mrf.mxu0
        %v1063 = vadd.f32 0.0, %v1062
        %1064 = vdwg.mxu0
        %1065 = vmatprep.subr.mxu0 0.0
        %1066 = vmatpush1.msra.mxu0 %v903
        %1067 = vmatprep.subr.mxu0 0.0
        %1068 = vmatpush1.msra.mxu0 %v900
        %1069 = vmatprep.subr.mxu0 0.0
        %1070 = vmatpush1.msra.mxu0 %v897
        %1071 = vmatprep.subr.mxu0 0.0
        %1072 = vmatpush1.msra.mxu0 %v894
        %1073 = vmatprep.subr.mxu0 0.0
        %1074 = vmatpush1.msra.mxu0 %v891
        %1075 = vmatprep.subr.mxu0 0.0
        %1076 = vmatpush1.msra.mxu0 %v888
        %1077 = vmatprep.subr.mxu0 0.0
        %1078 = vmatpush1.msra.mxu0 %v885
        %1079 = vmatprep.subr.mxu0 0.0
        %1080 = vmatpush1.msra.mxu0 %v882
        %1081 = vmatprep.subr.mxu0 0.0
        %1082 = vmatpush1.msra.mxu0 %v879
        %1083 = vmatprep.subr.mxu0 0.0
        %1084 = vmatpush1.msra.mxu0 %v876
        %1085 = vmatprep.subr.mxu0 0.0
        %1086 = vmatpush1.msra.mxu0 %v873
        %1087 = vmatprep.subr.mxu0 0.0
        %1088 = vmatpush1.msra.mxu0 %v870
        %1089 = vmatprep.subr.mxu0 0.0
        %1090 = vmatpush1.msra.mxu0 %v867
        %1091 = vmatprep.subr.mxu0 0.0
        %1092 = vmatpush1.msra.mxu0 %v864
        %1093 = vmatprep.subr.mxu0 0.0
        %1094 = vmatpush1.msra.mxu0 %v861
        %1095 = vmatprep.subr.mxu0 0.0
        %1096 = vmatpush1.msra.mxu0 %v858
        %1097 = vmatprep.subr.mxu0 0.0
        %1098 = vmatpush2.msra.mxu0 0.0
        %1099 = vmatprep.subr.mxu0 0.0
        %1100 = vmatpush2.msra.mxu0 0.0
        %1101 = vmatprep.subr.mxu0 0.0
        %1102 = vmatpush2.msra.mxu0 0.0
        %1103 = vmatprep.subr.mxu0 0.0
        %1104 = vmatpush2.msra.mxu0 0.0
        %1105 = vmatprep.subr.mxu0 0.0
        %1106 = vmatpush2.msra.mxu0 0.0
        %1107 = vmatprep.subr.mxu0 0.0
        %1108 = vmatpush2.msra.mxu0 0.0
        %1109 = vmatprep.subr.mxu0 0.0
        %1110 = vmatpush2.msra.mxu0 0.0
        %1111 = vmatprep.subr.mxu0 0.0
        %1112 = vmatpush2.msra.mxu0 0.0
        %1113 = vmatprep.subr.mxu0 0.0
        %1114 = vmatpush2.msra.mxu0 0.0
        %1115 = vmatprep.subr.mxu0 0.0
        %1116 = vmatpush2.msra.mxu0 0.0
        %1117 = vmatprep.subr.mxu0 0.0
        %1118 = vmatpush2.msra.mxu0 0.0
        %1119 = vmatprep.subr.mxu0 0.0
        %1120 = vmatpush2.msra.mxu0 0.0
        %1121 = vmatprep.subr.mxu0 0.0
        %1122 = vmatpush2.msra.mxu0 0.0
        %1123 = vmatprep.subr.mxu0 0.0
        %1124 = vmatpush2.msra.mxu0 0.0
        %1125 = vmatprep.subr.mxu0 0.0
        %1126 = vmatpush2.msra.mxu0 0.0
        %1127 = vmatprep.subr.mxu0 0.0
        %1128 = vmatpush2.msra.mxu0 0.0
        %1129 = vmatprep.mubr.f32.mxu0 0.0
        %1130 = vmatmul.mubr.f32.gmra.mxu0 %v840
        %v1131 = vpop.f32.mrf.mxu0
        %v1132 = vadd.f32 0.0, %v1131
        %v1133 = vpop.f32.mrf.mxu0
        %1134 = vmatprep.mubr.f32.mxu0 0.0
        %1135 = vmatmul.mubr.f32.gmra.mxu0 %v841
        %v1136 = vpop.f32.mrf.mxu0
        %v1137 = vadd.f32 0.0, %v1136
        %v1138 = vpop.f32.mrf.mxu0
        %1139 = vmatprep.mubr.f32.mxu0 0.0
        %1140 = vmatmul.mubr.f32.gmra.mxu0 %v842
        %v1141 = vpop.f32.mrf.mxu0
        %v1142 = vadd.f32 0.0, %v1141
        %v1143 = vpop.f32.mrf.mxu0
        %1144 = vmatprep.mubr.f32.mxu0 0.0
        %1145 = vmatmul.mubr.f32.gmra.mxu0 %v843
        %v1146 = vpop.f32.mrf.mxu0
        %v1147 = vadd.f32 0.0, %v1146
        %v1148 = vpop.f32.mrf.mxu0
        %1149 = vmatprep.mubr.f32.mxu0 0.0
        %1150 = vmatmul.mubr.f32.gmra.mxu0 %v844
        %v1151 = vpop.f32.mrf.mxu0
        %v1152 = vadd.f32 0.0, %v1151
        %v1153 = vpop.f32.mrf.mxu0
        %1154 = vmatprep.mubr.f32.mxu0 0.0
        %1155 = vmatmul.mubr.f32.gmra.mxu0 %v845
        %v1156 = vpop.f32.mrf.mxu0
        %v1157 = vadd.f32 0.0, %v1156
        %v1158 = vpop.f32.mrf.mxu0
        %1159 = vmatprep.mubr.f32.mxu0 0.0
        %1160 = vmatmul.mubr.f32.gmra.mxu0 %v846
        %v1161 = vpop.f32.mrf.mxu0
        %v1162 = vadd.f32 0.0, %v1161
        %v1163 = vpop.f32.mrf.mxu0
        %1164 = vmatprep.mubr.f32.mxu0 0.0
        %1165 = vmatmul.mubr.f32.gmra.mxu0 %v847
        %v1166 = vpop.f32.mrf.mxu0
        %v1167 = vadd.f32 0.0, %v1166
        %v1168 = vpop.f32.mrf.mxu0
        %1169 = vmatprep.mubr.f32.mxu0 0.0
        %1170 = vmatmul.mubr.f32.gmra.mxu0 %v848
        %v1171 = vpop.f32.mrf.mxu0
        %v1172 = vadd.f32 0.0, %v1171
        %v1173 = vpop.f32.mrf.mxu0
        %1174 = vmatprep.mubr.f32.mxu0 0.0
        %1175 = vmatmul.mubr.f32.gmra.mxu0 %v849
        %v1176 = vpop.f32.mrf.mxu0
        %v1177 = vadd.f32 0.0, %v1176
        %v1178 = vpop.f32.mrf.mxu0
        %1179 = vmatprep.mubr.f32.mxu0 0.0
        %1180 = vmatmul.mubr.f32.gmra.mxu0 %v850
        %v1181 = vpop.f32.mrf.mxu0
        %v1182 = vadd.f32 0.0, %v1181
        %v1183 = vpop.f32.mrf.mxu0
        %1184 = vmatprep.mubr.f32.mxu0 0.0
        %1185 = vmatmul.mubr.f32.gmra.mxu0 %v851
        %v1186 = vpop.f32.mrf.mxu0
        %v1187 = vadd.f32 0.0, %v1186
        %v1188 = vpop.f32.mrf.mxu0
        %1189 = vmatprep.mubr.f32.mxu0 0.0
        %1190 = vmatmul.mubr.f32.gmra.mxu0 %v852
        %v1191 = vpop.f32.mrf.mxu0
        %v1192 = vadd.f32 0.0, %v1191
        %v1193 = vpop.f32.mrf.mxu0
        %1194 = vmatprep.mubr.f32.mxu0 0.0
        %1195 = vmatmul.mubr.f32.gmra.mxu0 %v853
        %v1196 = vpop.f32.mrf.mxu0
        %v1197 = vadd.f32 0.0, %v1196
        %v1198 = vpop.f32.mrf.mxu0
        %1199 = vmatprep.mubr.f32.mxu0 0.0
        %1200 = vmatmul.mubr.f32.gmra.mxu0 %v854
        %v1201 = vpop.f32.mrf.mxu0
        %v1202 = vadd.f32 0.0, %v1201
        %v1203 = vpop.f32.mrf.mxu0
        %1204 = vmatprep.mubr.f32.mxu0 0.0
        %1205 = vmatmul.mubr.f32.gmra.mxu0 %v855
        %v1206 = vpop.f32.mrf.mxu0
        %v1207 = vadd.f32 0.0, %v1206
        %v1208 = vpop.f32.mrf.mxu0
        %1209 = vdwg.mxu0
        %1210 = vmatprep.subr.mxu0 0.0
        %1211 = vmatpush1.msra.mxu0 %v1063
        %1212 = vmatprep.subr.mxu0 0.0
        %1213 = vmatpush1.msra.mxu0 %v1057
        %1214 = vmatprep.subr.mxu0 0.0
        %1215 = vmatpush1.msra.mxu0 %v1051
        %1216 = vmatprep.subr.mxu0 0.0
        %1217 = vmatpush1.msra.mxu0 %v1045
        %1218 = vmatprep.subr.mxu0 0.0
        %1219 = vmatpush1.msra.mxu0 %v1039
        %1220 = vmatprep.subr.mxu0 0.0
        %1221 = vmatpush1.msra.mxu0 %v1033
        %1222 = vmatprep.subr.mxu0 0.0
        %1223 = vmatpush1.msra.mxu0 %v1027
        %1224 = vmatprep.subr.mxu0 0.0
        %1225 = vmatpush1.msra.mxu0 %v1021
        %1226 = vmatprep.subr.mxu0 0.0
        %1227 = vmatpush1.msra.mxu0 %v1015
        %1228 = vmatprep.subr.mxu0 0.0
        %1229 = vmatpush1.msra.mxu0 %v1009
        %1230 = vmatprep.subr.mxu0 0.0
        %1231 = vmatpush1.msra.mxu0 %v1003
        %1232 = vmatprep.subr.mxu0 0.0
        %1233 = vmatpush1.msra.mxu0 %v997
        %1234 = vmatprep.subr.mxu0 0.0
        %1235 = vmatpush1.msra.mxu0 %v991
        %1236 = vmatprep.subr.mxu0 0.0
        %1237 = vmatpush1.msra.mxu0 %v985
        %1238 = vmatprep.subr.mxu0 0.0
        %1239 = vmatpush1.msra.mxu0 %v979
        %1240 = vmatprep.subr.mxu0 0.0
        %1241 = vmatpush1.msra.mxu0 %v973
        %1242 = vmatprep.subr.mxu0 0.0
        %1243 = vmatpush2.msra.mxu0 %v1207
        %1244 = vmatprep.subr.mxu0 0.0
        %1245 = vmatpush2.msra.mxu0 %v1202
        %1246 = vmatprep.subr.mxu0 0.0
        %1247 = vmatpush2.msra.mxu0 %v1197
        %1248 = vmatprep.subr.mxu0 0.0
        %1249 = vmatpush2.msra.mxu0 %v1192
        %1250 = vmatprep.subr.mxu0 0.0
        %1251 = vmatpush2.msra.mxu0 %v1187
        %1252 = vmatprep.subr.mxu0 0.0
        %1253 = vmatpush2.msra.mxu0 %v1182
        %1254 = vmatprep.subr.mxu0 0.0
        %1255 = vmatpush2.msra.mxu0 %v1177
        %1256 = vmatprep.subr.mxu0 0.0
        %1257 = vmatpush2.msra.mxu0 %v1172
        %1258 = vmatprep.subr.mxu0 0.0
        %1259 = vmatpush2.msra.mxu0 %v1167
        %1260 = vmatprep.subr.mxu0 0.0
        %1261 = vmatpush2.msra.mxu0 %v1162
        %1262 = vmatprep.subr.mxu0 0.0
        %1263 = vmatpush2.msra.mxu0 %v1157
        %1264 = vmatprep.subr.mxu0 0.0
        %1265 = vmatpush2.msra.mxu0 %v1152
        %1266 = vmatprep.subr.mxu0 0.0
        %1267 = vmatpush2.msra.mxu0 %v1147
        %1268 = vmatprep.subr.mxu0 0.0
        %1269 = vmatpush2.msra.mxu0 %v1142
        %1270 = vmatprep.subr.mxu0 0.0
        %1271 = vmatpush2.msra.mxu0 %v1137
        %1272 = vmatprep.subr.mxu0 0.0
        %1273 = vmatpush2.msra.mxu0 %v1132
        %1274 = vmatprep.mubr.f32.mxu0 %v648
        %1275 = vmatmul.mubr.f32.gmra.mxu0 %v647
        %v1276 = vpop.f32.mrf.mxu0
        %v1277 = vadd.f32 0.0, %v1276
        %v1278 = vpop.f32.mrf.mxu0
        %1279 = vmatprep.mubr.f32.mxu0 %v650
        %1280 = vmatmul.mubr.f32.gmra.mxu0 %v649
        %v1281 = vpop.f32.mrf.mxu0
        %v1282 = vadd.f32 0.0, %v1281
        %v1283 = vpop.f32.mrf.mxu0
        %1284 = vmatprep.mubr.f32.mxu0 %v652
        %1285 = vmatmul.mubr.f32.gmra.mxu0 %v651
        %v1286 = vpop.f32.mrf.mxu0
        %v1287 = vadd.f32 0.0, %v1286
        %v1288 = vpop.f32.mrf.mxu0
        %1289 = vmatprep.mubr.f32.mxu0 %v654
        %1290 = vmatmul.mubr.f32.gmra.mxu0 %v653
        %v1291 = vpop.f32.mrf.mxu0
        %v1292 = vadd.f32 0.0, %v1291
        %v1293 = vpop.f32.mrf.mxu0
        %1294 = vmatprep.mubr.f32.mxu0 %v656
        %1295 = vmatmul.mubr.f32.gmra.mxu0 %v655
        %v1296 = vpop.f32.mrf.mxu0
        %v1297 = vadd.f32 0.0, %v1296
        %v1298 = vpop.f32.mrf.mxu0
        %1299 = vmatprep.mubr.f32.mxu0 %v658
        %1300 = vmatmul.mubr.f32.gmra.mxu0 %v657
        %v1301 = vpop.f32.mrf.mxu0
        %v1302 = vadd.f32 0.0, %v1301
        %v1303 = vpop.f32.mrf.mxu0
        %1304 = vmatprep.mubr.f32.mxu0 %v660
        %1305 = vmatmul.mubr.f32.gmra.mxu0 %v659
        %v1306 = vpop.f32.mrf.mxu0
        %v1307 = vadd.f32 0.0, %v1306
        %v1308 = vpop.f32.mrf.mxu0
        %1309 = vmatprep.mubr.f32.mxu0 %v662
        %1310 = vmatmul.mubr.f32.gmra.mxu0 %v661
        %v1311 = vpop.f32.mrf.mxu0
        %v1312 = vadd.f32 0.0, %v1311
        %v1313 = vpop.f32.mrf.mxu0
        %1314 = vmatprep.mubr.f32.mxu0 %v664
        %1315 = vmatmul.mubr.f32.gmra.mxu0 %v663
        %v1316 = vpop.f32.mrf.mxu0
        %v1317 = vadd.f32 0.0, %v1316
        %v1318 = vpop.f32.mrf.mxu0
        %1319 = vmatprep.mubr.f32.mxu0 %v666
        %1320 = vmatmul.mubr.f32.gmra.mxu0 %v665
        %v1321 = vpop.f32.mrf.mxu0
        %v1322 = vadd.f32 0.0, %v1321
        %v1323 = vpop.f32.mrf.mxu0
        %1324 = vmatprep.mubr.f32.mxu0 %v668
        %1325 = vmatmul.mubr.f32.gmra.mxu0 %v667
        %v1326 = vpop.f32.mrf.mxu0
        %v1327 = vadd.f32 0.0, %v1326
        %v1328 = vpop.f32.mrf.mxu0
        %1329 = vmatprep.mubr.f32.mxu0 %v670
        %1330 = vmatmul.mubr.f32.gmra.mxu0 %v669
        %v1331 = vpop.f32.mrf.mxu0
        %v1332 = vadd.f32 0.0, %v1331
        %v1333 = vpop.f32.mrf.mxu0
        %1334 = vmatprep.mubr.f32.mxu0 %v672
        %1335 = vmatmul.mubr.f32.gmra.mxu0 %v671
        %v1336 = vpop.f32.mrf.mxu0
        %v1337 = vadd.f32 0.0, %v1336
        %v1338 = vpop.f32.mrf.mxu0
        %1339 = vmatprep.mubr.f32.mxu0 %v674
        %1340 = vmatmul.mubr.f32.gmra.mxu0 %v673
        %v1341 = vpop.f32.mrf.mxu0
        %v1342 = vadd.f32 0.0, %v1341
        %v1343 = vpop.f32.mrf.mxu0
        %1344 = vmatprep.mubr.f32.mxu0 %v676
        %1345 = vmatmul.mubr.f32.gmra.mxu0 %v675
        %v1346 = vpop.f32.mrf.mxu0
        %v1347 = vadd.f32 0.0, %v1346
        %v1348 = vpop.f32.mrf.mxu0
        %1349 = vmatprep.mubr.f32.mxu0 %v678
        %1350 = vmatmul.mubr.f32.gmra.mxu0 %v677
        %v1351 = vpop.f32.mrf.mxu0
        %v1352 = vadd.f32 0.0, %v1351
        %v1353 = vpop.f32.mrf.mxu0
        %1354 = vdwg.mxu0
        %v1355 = vadd.f32 %v971, %v1277
        %v1356 = vadd.f32 %v977, %v1282
        %v1357 = vadd.f32 %v983, %v1287
        %v1358 = vadd.f32 %v989, %v1292
        %v1359 = vadd.f32 %v995, %v1297
        %v1360 = vadd.f32 %v1001, %v1302
        %v1361 = vadd.f32 %v1007, %v1307
        %v1362 = vadd.f32 %v1013, %v1312
        %v1363 = vadd.f32 %v1019, %v1317
        %v1364 = vadd.f32 %v1025, %v1322
        %v1365 = vadd.f32 %v1031, %v1327
        %v1366 = vadd.f32 %v1037, %v1332
        %v1367 = vadd.f32 %v1043, %v1337
        %v1368 = vadd.f32 %v1049, %v1342
        %v1369 = vadd.f32 %v1055, %v1347
        %v1370 = vadd.f32 %v1061, %v1352
        %v1371 = vmax.f32 %v1355, 0.0
        %v1372 = vmax.f32 %v1356, 0.0
        %v1373 = vmax.f32 %v1357, 0.0
        %v1374 = vmax.f32 %v1358, 0.0
        %v1375 = vmax.f32 %v1359, 0.0
        %v1376 = vmax.f32 %v1360, 0.0
        %v1377 = vmax.f32 %v1361, 0.0
        %v1378 = vmax.f32 %v1362, 0.0
        %v1379 = vmax.f32 %v1363, 0.0
        %v1380 = vmax.f32 %v1364, 0.0
        %v1381 = vmax.f32 %v1365, 0.0
        %v1382 = vmax.f32 %v1366, 0.0
        %v1383 = vmax.f32 %v1367, 0.0
        %v1384 = vmax.f32 %v1368, 0.0
        %v1385 = vmax.f32 %v1369, 0.0
        %v1386 = vmax.f32 %v1370, 0.0
        %v1387 = vld [vmem:[%s4] sm:$0xff]
        %v1388 = vld [vmem:[%s4 + $0x8] sm:$0xff]
        %v1389 = vld [vmem:[%s4 + $0x10] sm:$0xff]
        %v1390 = vld [vmem:[%s4 + $0x18] sm:$0xff]
        %v1391 = vld [vmem:[%s4 + $0x20] sm:$0xff]
        %v1392 = vld [vmem:[%s4 + $0x28] sm:$0xff]
        %v1393 = vld [vmem:[%s4 + $0x30] sm:$0xff]
        %v1394 = vld [vmem:[%s4 + $0x38] sm:$0xff]
        %v1395 = vld [vmem:[%s4 + $0x40] sm:$0xff]
        %v1396 = vld [vmem:[%s4 + $0x48] sm:$0xff]
        %v1397 = vld [vmem:[%s4 + $0x50] sm:$0xff]
        %v1398 = vld [vmem:[%s4 + $0x58] sm:$0xff]
        %v1399 = vld [vmem:[%s4 + $0x60] sm:$0xff]
        %v1400 = vld [vmem:[%s4 + $0x68] sm:$0xff]
        %v1401 = vld [vmem:[%s4 + $0x70] sm:$0xff]
        %v1402 = vld [vmem:[%s4 + $0x78] sm:$0xff]
        %1403 = vmatprep.subr.mxu0 0.0
        %1404 = vmatpush1.msra.mxu0 %v1402
        %1405 = vmatprep.subr.mxu0 0.0
        %1406 = vmatpush1.msra.mxu0 %v1401
        %1407 = vmatprep.subr.mxu0 0.0
        %1408 = vmatpush1.msra.mxu0 %v1400
        %1409 = vmatprep.subr.mxu0 0.0
        %1410 = vmatpush1.msra.mxu0 %v1399
        %1411 = vmatprep.subr.mxu0 0.0
        %1412 = vmatpush1.msra.mxu0 %v1398
        %1413 = vmatprep.subr.mxu0 0.0
        %1414 = vmatpush1.msra.mxu0 %v1397
        %1415 = vmatprep.subr.mxu0 0.0
        %1416 = vmatpush1.msra.mxu0 %v1396
        %1417 = vmatprep.subr.mxu0 0.0
        %1418 = vmatpush1.msra.mxu0 %v1395
        %1419 = vmatprep.subr.mxu0 0.0
        %1420 = vmatpush1.msra.mxu0 %v1394
        %1421 = vmatprep.subr.mxu0 0.0
        %1422 = vmatpush1.msra.mxu0 %v1393
        %1423 = vmatprep.subr.mxu0 0.0
        %1424 = vmatpush1.msra.mxu0 %v1392
        %1425 = vmatprep.subr.mxu0 0.0
        %1426 = vmatpush1.msra.mxu0 %v1391
        %1427 = vmatprep.subr.mxu0 0.0
        %1428 = vmatpush1.msra.mxu0 %v1390
        %1429 = vmatprep.subr.mxu0 0.0
        %1430 = vmatpush1.msra.mxu0 %v1389
        %1431 = vmatprep.subr.mxu0 0.0
        %1432 = vmatpush1.msra.mxu0 %v1388
        %1433 = vmatprep.subr.mxu0 0.0
        %1434 = vmatpush1.msra.mxu0 %v1387
        %1435 = vmatprep.subr.mxu0 0.0
        %1436 = vmatpush2.msra.mxu0 0.0
        %1437 = vmatprep.subr.mxu0 0.0
        %1438 = vmatpush2.msra.mxu0 0.0
        %1439 = vmatprep.subr.mxu0 0.0
        %1440 = vmatpush2.msra.mxu0 0.0
        %1441 = vmatprep.subr.mxu0 0.0
        %1442 = vmatpush2.msra.mxu0 0.0
        %1443 = vmatprep.subr.mxu0 0.0
        %1444 = vmatpush2.msra.mxu0 0.0
        %1445 = vmatprep.subr.mxu0 0.0
        %1446 = vmatpush2.msra.mxu0 0.0
        %1447 = vmatprep.subr.mxu0 0.0
        %1448 = vmatpush2.msra.mxu0 0.0
        %1449 = vmatprep.subr.mxu0 0.0
        %1450 = vmatpush2.msra.mxu0 0.0
        %1451 = vmatprep.subr.mxu0 0.0
        %1452 = vmatpush2.msra.mxu0 0.0
        %1453 = vmatprep.subr.mxu0 0.0
        %1454 = vmatpush2.msra.mxu0 0.0
        %1455 = vmatprep.subr.mxu0 0.0
        %1456 = vmatpush2.msra.mxu0 0.0
        %1457 = vmatprep.subr.mxu0 0.0
        %1458 = vmatpush2.msra.mxu0 0.0
        %1459 = vmatprep.subr.mxu0 0.0
        %1460 = vmatpush2.msra.mxu0 0.0
        %1461 = vmatprep.subr.mxu0 0.0
        %1462 = vmatpush2.msra.mxu0 0.0
        %1463 = vmatprep.subr.mxu0 0.0
        %1464 = vmatpush2.msra.mxu0 0.0
        %1465 = vmatprep.subr.mxu0 0.0
        %1466 = vmatpush2.msra.mxu0 0.0
        %1467 = vmatprep.mubr.f32.mxu0 0.0
        %1468 = vmatmul.mubr.f32.gmra.mxu0 %v1371
        %v1469 = vpop.f32.mrf.mxu0
        %v1470 = vadd.f32 0.0, %v1469
        %v1471 = vpop.f32.mrf.mxu0
        %1472 = vmatprep.mubr.f32.mxu0 0.0
        %1473 = vmatmul.mubr.f32.gmra.mxu0 %v1372
        %v1474 = vpop.f32.mrf.mxu0
        %v1475 = vadd.f32 0.0, %v1474
        %v1476 = vpop.f32.mrf.mxu0
        %1477 = vmatprep.mubr.f32.mxu0 0.0
        %1478 = vmatmul.mubr.f32.gmra.mxu0 %v1373
        %v1479 = vpop.f32.mrf.mxu0
        %v1480 = vadd.f32 0.0, %v1479
        %v1481 = vpop.f32.mrf.mxu0
        %1482 = vmatprep.mubr.f32.mxu0 0.0
        %1483 = vmatmul.mubr.f32.gmra.mxu0 %v1374
        %v1484 = vpop.f32.mrf.mxu0
        %v1485 = vadd.f32 0.0, %v1484
        %v1486 = vpop.f32.mrf.mxu0
        %1487 = vmatprep.mubr.f32.mxu0 0.0
        %1488 = vmatmul.mubr.f32.gmra.mxu0 %v1375
        %v1489 = vpop.f32.mrf.mxu0
        %v1490 = vadd.f32 0.0, %v1489
        %v1491 = vpop.f32.mrf.mxu0
        %1492 = vmatprep.mubr.f32.mxu0 0.0
        %1493 = vmatmul.mubr.f32.gmra.mxu0 %v1376
        %v1494 = vpop.f32.mrf.mxu0
        %v1495 = vadd.f32 0.0, %v1494
        %v1496 = vpop.f32.mrf.mxu0
        %1497 = vmatprep.mubr.f32.mxu0 0.0
        %1498 = vmatmul.mubr.f32.gmra.mxu0 %v1377
        %v1499 = vpop.f32.mrf.mxu0
        %v1500 = vadd.f32 0.0, %v1499
        %v1501 = vpop.f32.mrf.mxu0
        %1502 = vmatprep.mubr.f32.mxu0 0.0
        %1503 = vmatmul.mubr.f32.gmra.mxu0 %v1378
        %v1504 = vpop.f32.mrf.mxu0
        %v1505 = vadd.f32 0.0, %v1504
        %v1506 = vpop.f32.mrf.mxu0
        %1507 = vmatprep.mubr.f32.mxu0 0.0
        %1508 = vmatmul.mubr.f32.gmra.mxu0 %v1379
        %v1509 = vpop.f32.mrf.mxu0
        %v1510 = vadd.f32 0.0, %v1509
        %v1511 = vpop.f32.mrf.mxu0
        %1512 = vmatprep.mubr.f32.mxu0 0.0
        %1513 = vmatmul.mubr.f32.gmra.mxu0 %v1380
        %v1514 = vpop.f32.mrf.mxu0
        %v1515 = vadd.f32 0.0, %v1514
        %v1516 = vpop.f32.mrf.mxu0
        %1517 = vmatprep.mubr.f32.mxu0 0.0
        %1518 = vmatmul.mubr.f32.gmra.mxu0 %v1381
        %v1519 = vpop.f32.mrf.mxu0
        %v1520 = vadd.f32 0.0, %v1519
        %v1521 = vpop.f32.mrf.mxu0
        %1522 = vmatprep.mubr.f32.mxu0 0.0
        %1523 = vmatmul.mubr.f32.gmra.mxu0 %v1382
        %v1524 = vpop.f32.mrf.mxu0
        %v1525 = vadd.f32 0.0, %v1524
        %v1526 = vpop.f32.mrf.mxu0
        %1527 = vmatprep.mubr.f32.mxu0 0.0
        %1528 = vmatmul.mubr.f32.gmra.mxu0 %v1383
        %v1529 = vpop.f32.mrf.mxu0
        %v1530 = vadd.f32 0.0, %v1529
        %v1531 = vpop.f32.mrf.mxu0
        %1532 = vmatprep.mubr.f32.mxu0 0.0
        %1533 = vmatmul.mubr.f32.gmra.mxu0 %v1384
        %v1534 = vpop.f32.mrf.mxu0
        %v1535 = vadd.f32 0.0, %v1534
        %v1536 = vpop.f32.mrf.mxu0
        %1537 = vmatprep.mubr.f32.mxu0 0.0
        %1538 = vmatmul.mubr.f32.gmra.mxu0 %v1385
        %v1539 = vpop.f32.mrf.mxu0
        %v1540 = vadd.f32 0.0, %v1539
        %v1541 = vpop.f32.mrf.mxu0
        %1542 = vmatprep.mubr.f32.mxu0 0.0
        %1543 = vmatmul.mubr.f32.gmra.mxu0 %v1386
        %v1544 = vpop.f32.mrf.mxu0
        %v1545 = vadd.f32 0.0, %v1544
        %v1546 = vpop.f32.mrf.mxu0
        %1547 = vdwg.mxu0
        %1548 = vst [vmem:[%s257] sm:$0xff] %v1470
        %1549 = vst [vmem:[%s257 + $0x8] sm:$0xff] %v1475
        %1550 = vst [vmem:[%s257 + $0x10] sm:$0xff] %v1480
        %1551 = vst [vmem:[%s257 + $0x18] sm:$0xff] %v1485
        %1552 = vst [vmem:[%s257 + $0x20] sm:$0xff] %v1490
        %1553 = vst [vmem:[%s257 + $0x28] sm:$0xff] %v1495
        %1554 = vst [vmem:[%s257 + $0x30] sm:$0xff] %v1500
        %1555 = vst [vmem:[%s257 + $0x38] sm:$0xff] %v1505
        %1556 = vst [vmem:[%s257 + $0x40] sm:$0xff] %v1510
        %1557 = vst [vmem:[%s257 + $0x48] sm:$0xff] %v1515
        %1558 = vst [vmem:[%s257 + $0x50] sm:$0xff] %v1520
        %1559 = vst [vmem:[%s257 + $0x58] sm:$0xff] %v1525
        %1560 = vst [vmem:[%s257 + $0x60] sm:$0xff] %v1530
        %1561 = vst [vmem:[%s257 + $0x68] sm:$0xff] %v1535
        %1562 = vst [vmem:[%s257 + $0x70] sm:$0xff] %v1540
        %1563 = vst [vmem:[%s257 + $0x78] sm:$0xff] %v1545
        %s1564 = sand.u32 %s145, 1
        %s1565 = scalar_lea.sflag [#allocation4], %s1564
        %s1566 = sand.u32 %s145, 1
        %s1567 = smul.addr %s1566, 128
        %s1568 = scalar_lea.vmem [#allocation5], %s1567
        // Predicated region
        $region45: #{tpu_custom_call.1} parent=39 // pred_check
          %p1569 = pneg %p155
        $region46: #{tpu_custom_call.1} parent=39 // pred_check_branch
          %1571 = sbr.rel (%p1569) target = $region48
        $region47: #{tpu_custom_call.1} parent=39 // pred_region
          %s1573 = ssub.s32 2048, 2048
          %1574 = vsyncadd %s1565, %s1573
          %s1575 = smul.addr %s22, 16
          %s1576 = smul.addr %s1575, 128
          %s1577 = scalar_lea.hbm %s5, %s1576
          %s1578 = sshll.u32 %s1568, 4
          %s1579 = int_to_ptr.vmem [resolvable:$true] %s1578
          %1584 = dma.vmem_to_hbm [thread:$0]  %s1579, 2048, %s1577, %s1565, 128, 128, 8
        $region48: #{tpu_custom_call.1} parent=39 // pred_fallthru
          _
      $region40: #{tpu_custom_call.1} parent=5 // pred_fallthru
        _
      %p1585 = scmp.le.s32.totalorder 2, %s17
      // Predicated region
      $region49: #{tpu_custom_call.1} parent=5 // pred_check
        %p1586 = pneg %p1585
      $region50: #{tpu_custom_call.1} parent=5 // pred_check_branch
        %1588 = sbr.rel (%p1586) target = $region52
      $region51: #{tpu_custom_call.1} parent=5 // pred_region
        %s1589 = ssub.s32 %s17, 2
        // Predicated region
        $region53: #{tpu_custom_call.1} parent=51 // pred_check
          %p1590 = pneg %p161
        $region54: #{tpu_custom_call.1} parent=51 // pred_check_branch
          %1592 = sbr.rel (%p1590) target = $region56
        $region55: #{tpu_custom_call.1} parent=51 // pred_region
          %s1593 = sand.u32 %s146, 1
          %s1594 = scalar_lea.sflag [#allocation4], %s1593
          %s1595 = sand.u32 %s146, 1
          %s1596 = smul.addr %s1595, 128
          %s1597 = scalar_lea.vmem [#allocation5], %s1596
          %1598 = dma.done %s1594, 2048
        $region56: #{tpu_custom_call.1} parent=51 // pred_fallthru
          _
      $region52: #{tpu_custom_call.1} parent=5 // pred_fallthru
        _
    $region6: #{tpu_custom_call.1} parent=1 // loop_footer
      %s21 = sadd.s32 1, %s17
    $region7: #{tpu_custom_call.1} parent=1 // loop_footer_branch
      %16 = sbr.rel target = $region3
    $region8: #{tpu_custom_call.1} parent=1 // loop_exit
      _
    %1599 = vsyncpa [#allocation3], 1
    %s1600 = scalar_lea.sflag [#allocation3], 1
    %1601 = vsyncpa %s1600, 1
    %1602 = vsyncpa [#allocation4], 1
    %s1603 = scalar_lea.sflag [#allocation4], 1
    %1604 = vsyncpa %s1603, 1

</llo_original>
